<compile_context>
chip_gen: v7x
topology: tpu7x:2x2x1
jax: 0.10.0
libtpu: 0.0.40
codegen_flags: <defaults>
</compile_context>

<pallas_src>
import functools

import jax
import jax.numpy as jnp
from jax.experimental import pallas as pl
from jax.experimental.pallas import tpu as pltpu


def _round_up(x, m):
    return (x + m - 1) // m * m


def _pick_tile_m(m_total, max_tile=1024, min_tiles=8):
    """Big tiles amortize the ~0.35us/grid-step overhead; keep >= min_tiles
    steps so the 'parallel' grid axis can still be split across TensorCores."""
    t = _round_up(max(1, -(-m_total // min_tiles)), 8)
    return max(8, min(max_tile, t))


# ----------------------------------------------------------------------------
# Pallas kernel: fused (patches @ W + b) with optional LeakyReLU
# ----------------------------------------------------------------------------
def _mm_bias_act_kernel(pid_ref, x_ref, w_ref, b_ref, o_ref, *, slope):
    # x: (tile_m, Kc) bf16, w: (Kc, N_pad) bf16, b: (1, N_pad) f32.
    del pid_ref  # only consumed by the index_maps
    acc = jnp.dot(x_ref[...], w_ref[...], preferred_element_type=jnp.float32)
    acc = acc + b_ref[...]
    if slope is not None:
        acc = jnp.where(acc >= 0, acc, acc * slope)
    o_ref[...] = acc.astype(o_ref.dtype)


# ----------------------------------------------------------------------------
# One Conv2d([K,1], stride=[s,1]) (+ LeakyReLU) layer for ALL periods at once
# ----------------------------------------------------------------------------
def conv_layer_all_periods(h_list, w_list, b_list, stride, slope,
                           *, max_tile_m=1024):
    """h_list: per-period NHWC activations (B, H_p, W_p=period, Cin)
       w_list: per-period PyTorch-layout weights (Cout, Cin, K, 1)
       b_list: per-period biases (Cout,)"""
    num_p = len(h_list)
    cout, cin, ksz, _ = w_list[0].shape
    pad = (ksz - 1) // 2
    kc = ksz * cin
    kc_pad = _round_up(kc, 16)            # bf16-friendly contraction dim
    n_pad = _round_up(cout, 128)          # lane-dense stores / full MXU columns

    # ---- im2col glue (XLA), done in bf16 to halve the patch HBM traffic ----
    # TODO(synk): fuse im2col into the kernel (overlapping strided H windows
    # via manual DMA) to remove the K-fold patch materialization entirely.
    patches, m_list, hout_list = [], [], []
    for h in h_list:
        bsz, hgt, wd, cin_ = h.shape
        assert cin_ == cin
        h16 = jnp.pad(h.astype(jnp.bfloat16),
                      ((0, 0), (pad, pad), (0, 0), (0, 0)))
        h_out = (hgt + 2 * pad - ksz) // stride + 1
        taps = [h16[:, k:k + (h_out - 1) * stride + 1:stride, :, :]
                for k in range(ksz)]
        pt = jnp.stack(taps, axis=3).reshape(bsz * h_out * wd, kc)
        patches.append(pt)
        m_list.append(bsz * h_out * wd)
        hout_list.append(h_out)

    tile_m = _pick_tile_m(sum(m_list), max_tile_m)

    # Tile-aligned concat along M so no tile straddles two periods.
    segs, pid, m_pad_list = [], [], []
    for p in range(num_p):
        m_p = m_list[p]
        m_pad = _round_up(m_p, tile_m)
        segs.append(patches[p])
        if m_pad > m_p:
            segs.append(jnp.zeros((m_pad - m_p, kc), jnp.bfloat16))
        pid += [p] * (m_pad // tile_m)
        m_pad_list.append(m_pad)
    x_cat = jnp.concatenate(segs, axis=0)
    if kc_pad != kc:
        x_cat = jnp.pad(x_cat, ((0, 0), (0, kc_pad - kc)))
    num_tiles = len(pid)
    pid_arr = jnp.asarray(pid, dtype=jnp.int32)

    # Weights: (Cout, Cin, K, 1) -> (K*Cin, Cout) -> zero-pad K/N -> stack P.
    w_stack = jnp.stack([
        jnp.pad(jnp.transpose(w[:, :, :, 0], (2, 1, 0)).reshape(kc, cout),
                ((0, kc_pad - kc), (0, n_pad - cout)))
        for w in w_list]).astype(jnp.bfloat16)                 # (P, Kc, N_pad)
    b_stack = jnp.stack([
        jnp.pad(b.astype(jnp.float32), (0, n_pad - cout)).reshape(1, n_pad)
        for b in b_list])                                      # (P, 1, N_pad)

    out_cat = pl.pallas_call(
        functools.partial(_mm_bias_act_kernel, slope=slope),
        out_shape=jax.ShapeDtypeStruct((x_cat.shape[0], n_pad), jnp.float32),
        grid_spec=pltpu.PrefetchScalarGridSpec(
            num_scalar_prefetch=1,
            grid=(num_tiles,),
            in_specs=[
                pl.BlockSpec((tile_m, kc_pad), lambda t, pid_ref: (t, 0)),
                pl.BlockSpec((None, kc_pad, n_pad),
                             lambda t, pid_ref: (pid_ref[t], 0, 0)),
                pl.BlockSpec((None, 1, n_pad),
                             lambda t, pid_ref: (pid_ref[t], 0, 0)),
            ],
            out_specs=pl.BlockSpec((tile_m, n_pad), lambda t, pid_ref: (t, 0)),
        ),
        compiler_params=pltpu.CompilerParams(
            dimension_semantics=("parallel",)),
    )(pid_arr, x_cat, w_stack, b_stack)

    # Split per period, strip M / channel padding, back to NHWC.
    outs, off = [], 0
    for p in range(num_p):
        bsz, _, wd, _ = h_list[p].shape
        o = out_cat[off:off + m_list[p], :cout]
        outs.append(o.reshape(bsz, hout_list[p], wd, cout))
        off += m_pad_list[p]
    return outs


# ----------------------------------------------------------------------------
# MultiPeriodDiscriminator forward
# ----------------------------------------------------------------------------
def transform_to_2d_nhwc(x, period):
    """x: (B, C, T) -> NHWC (B, T//period, period, C), reflect-padding T."""
    bsz, ch, t = x.shape
    if t % period:
        padlen = period - t % period
        assert padlen < t, "reflect pad requires pad < T"
        x = jnp.pad(x, ((0, 0), (0, 0), (0, padlen)), mode="reflect")
        t = x.shape[-1]
    x = x.reshape(bsz, ch, t // period, period)       # NCHW (B, C, H, W)
    return jnp.transpose(x, (0, 2, 3, 1))             # internal NHWC


def multi_period_discriminator_forward(x, weights, biases, *, periods,
                                       strides, slopes):
    """Matches the PyTorch module: returns (outputs, layer_outputs) where
    outputs[i] is (B, 1, H_f*W) for discriminator i and layer_outputs is the
    concatenation over discriminators of their per-layer NCHW feature maps."""
    num_p = len(periods)
    hs = [transform_to_2d_nhwc(x, p) for p in periods]
    per_period = [[] for _ in range(num_p)]
    for layer in range(len(strides)):
        hs = conv_layer_all_periods(
            hs,
            [weights[p][layer] for p in range(num_p)],
            [biases[p][layer] for p in range(num_p)],
            strides[layer], slopes[layer])
        for p in range(num_p):                         # NCHW layer outputs
            per_period[p].append(jnp.transpose(hs[p], (0, 3, 1, 2)))
    outputs, layer_outputs = [], []
    for p in range(num_p):
        last = per_period[p][-1]                       # (B, 1, H_f, W)
        outputs.append(last.reshape(last.shape[0], 1, -1))
        layer_outputs += per_period[p]
    return outputs, layer_outputs


# ----------------------------------------------------------------------------
# Deterministic parameter init (mirrors PeriodDiscriminator.__init__ shapes)
# ----------------------------------------------------------------------------
def init_period_disc_params(key, in_channels, hidden_channels, out_channels,
                            kernel_size, strides, out_kernel_size):
    # weight_norm at init is a forward identity -> no g/v reparameterization.
    chans = [in_channels] + list(hidden_channels)
    ws, bs = [], []
    for cin, cout in zip(chans[:-1], chans[1:]):
        key, k1, k2 = jax.random.split(key, 3)
        fan_in = cin * kernel_size
        ws.append(jax.random.normal(k1, (cout, cin, kernel_size, 1),
                                    jnp.float32) / jnp.sqrt(float(fan_in)))
        bs.append(jax.random.normal(k2, (cout,), jnp.float32) * 0.01)
    key, k1, k2 = jax.random.split(key, 3)
    fan_in = chans[-1] * out_kernel_size
    ws.append(jax.random.normal(
        k1, (out_channels, chans[-1], out_kernel_size, 1),
        jnp.float32) / jnp.sqrt(float(fan_in)))
    bs.append(jax.random.normal(k2, (out_channels,), jnp.float32) * 0.01)
    return ws, bs


if __name__ == "__main__":
    # "model_config" equivalent (small hidden sizes for a quick demo).
    periods = (2, 3, 5, 7, 11)
    in_channels = 1
    out_channels = 1
    hidden_channels = [16, 32, 32, 32, 32]
    kernel_size = 5
    conv_strides = [3, 3, 3, 3, 1]
    out_kernel_size = 3

    layer_strides = tuple(conv_strides) + (1,)          # final conv stride 1
    layer_slopes = tuple([0.1] * len(conv_strides)) + (None,)  # no final act

    key = jax.random.PRNGKey(0)
    key, xkey = jax.random.split(key)
    bsz, chans, seq = 2, 1, 240
    x = jax.random.normal(xkey, (bsz, chans, seq), jnp.float32)

    weights, biases = [], []
    for _ in periods:
        key, sub = jax.random.split(key)
        ws, bs = init_period_disc_params(sub, in_channels, hidden_channels,
                                         out_channels, kernel_size,
                                         conv_strides, out_kernel_size)
        weights.append(ws)
        biases.append(bs)

    fwd = jax.jit(functools.partial(
        multi_period_discriminator_forward,
        periods=periods, strides=layer_strides, slopes=layer_slopes))

    outputs, layer_outputs = fwd(x, weights, biases)
    jax.block_until_ready(outputs)
    jax.block_until_ready(layer_outputs)

    assert len(outputs) == len(periods)
    assert len(layer_outputs) == len(periods) * (len(hidden_channels) + 1)
    assert all(bool(jnp.all(jnp.isfinite(o))) for o in outputs)
    print("KERNEL_OK")
</pallas_src>

<mosaic_0001>
module attributes {stable_mosaic.version = 11 : i64} {
  func.func @_mm_bias_act_kernel(%arg0: i32, %arg1: memref<10xi32, #tpu.memory_space<smem>>, %arg2: memref<104x16xbf16, #tpu.memory_space<vmem>>, %arg3: memref<1x16x128xbf16, #tpu.memory_space<vmem>>, %arg4: memref<1x1x128xf32, #tpu.memory_space<vmem>>, %arg5: memref<104x128xf32, #tpu.memory_space<vmem>>) attributes {dimension_semantics = [#tpu.dimension_semantics<parallel>], iteration_bounds = array<i64: 10>, scalar_prefetch = 1 : i64, scratch_operands = 0 : i64, tpu.core_type = #tpu.core_type<tc>, window_params = [{transform_indices = @transform_0, window_bounds = array<i64: 104, 16>}, {transform_indices = @transform_1, window_bounds = array<i64: 1, 16, 128>}, {transform_indices = @transform_2, window_bounds = array<i64: 1, 1, 128>}, {transform_indices = @transform_3, window_bounds = array<i64: 104, 128>}]} {
    %c0 = arith.constant 0 : index
    %c0_0 = arith.constant 0 : index
    %0 = vector.load %arg2[%c0, %c0_0] : memref<104x16xbf16, #tpu.memory_space<vmem>>, vector<104x16xbf16>
    %c0_1 = arith.constant 0 : index
    %c0_2 = arith.constant 0 : index
    %c0_3 = arith.constant 0 : index
    %1 = vector.load %arg3[%c0_1, %c0_2, %c0_3] : memref<1x16x128xbf16, #tpu.memory_space<vmem>>, vector<1x16x128xbf16>
    %2 = vector.shape_cast %1 : vector<1x16x128xbf16> to vector<16x128xbf16>
    %cst = arith.constant dense<0.000000e+00> : vector<104x128xf32>
    %3 = tpu.matmul %0, %2, %cst {dimension_numbers = #tpu.dot_dimension_numbers<[1], [0], [0], [1], [0, 0, 1, 1], [], []>} : vector<104x16xbf16>, vector<16x128xbf16>, vector<104x128xf32> -> vector<104x128xf32>
    %c0_4 = arith.constant 0 : index
    %c0_5 = arith.constant 0 : index
    %c0_6 = arith.constant 0 : index
    %4 = vector.load %arg4[%c0_4, %c0_5, %c0_6] : memref<1x1x128xf32, #tpu.memory_space<vmem>>, vector<1x1x128xf32>
    %5 = vector.shape_cast %4 : vector<1x1x128xf32> to vector<1x128xf32>
    %6 = vector.broadcast %5 : vector<1x128xf32> to vector<104x128xf32>
    %7 = arith.addf %3, %6 : vector<104x128xf32>
    %cst_7 = arith.constant 0.000000e+00 : f32
    %8 = vector.broadcast %cst_7 : f32 to vector<104x128xf32>
    %9 = arith.cmpf oge, %7, %8 : vector<104x128xf32>
    %cst_8 = arith.constant 1.000000e-01 : f32
    %10 = vector.broadcast %cst_8 : f32 to vector<104x128xf32>
    %11 = arith.mulf %7, %10 : vector<104x128xf32>
    %12 = arith.select %9, %7, %11 : vector<104x128xi1>, vector<104x128xf32>
    %c0_9 = arith.constant 0 : index
    %c0_10 = arith.constant 0 : index
    %13 = vector.load %arg5[%c0_9, %c0_10] : memref<104x128xf32, #tpu.memory_space<vmem>>, vector<104x128xf32>
    tpu.vector_store %arg5[%c0_9, %c0_10], %12 {strides = array<i32>} : memref<104x128xf32, #tpu.memory_space<vmem>>, vector<104x128xf32>,
    return
  }
  func.func @transform_0(%arg0: i32, %arg1: memref<10xi32, #tpu.memory_space<smem>>) -> (i32, i32) {
    %c0_i32 = arith.constant 0 : i32
    %c0_i32_0 = arith.constant 0 : i32
    return %arg0, %c0_i32 : i32, i32
  }
  func.func @transform_1(%arg0: i32, %arg1: memref<10xi32, #tpu.memory_space<smem>>) -> (i32, i32, i32) {
    %0 = arith.index_cast %arg0 : i32 to index
    %1 = memref.load %arg1[%0] : memref<10xi32, #tpu.memory_space<smem>>
    %c0_i32 = arith.constant 0 : i32
    %c0_i32_0 = arith.constant 0 : i32
    %c0_i32_1 = arith.constant 0 : i32
    return %1, %c0_i32, %c0_i32_0 : i32, i32, i32
  }
  func.func @transform_2(%arg0: i32, %arg1: memref<10xi32, #tpu.memory_space<smem>>) -> (i32, i32, i32) {
    %0 = arith.index_cast %arg0 : i32 to index
    %1 = memref.load %arg1[%0] : memref<10xi32, #tpu.memory_space<smem>>
    %c0_i32 = arith.constant 0 : i32
    %c0_i32_0 = arith.constant 0 : i32
    %c0_i32_1 = arith.constant 0 : i32
    return %1, %c0_i32, %c0_i32_0 : i32, i32, i32
  }
  func.func @transform_3(%arg0: i32, %arg1: memref<10xi32, #tpu.memory_space<smem>>) -> (i32, i32) {
    %c0_i32 = arith.constant 0 : i32
    %c0_i32_0 = arith.constant 0 : i32
    return %arg0, %c0_i32 : i32, i32
  }
}

module attributes {stable_mosaic.version = 11 : i64} {
  func.func @_mm_bias_act_kernel(%arg0: i32, %arg1: memref<10xi32, #tpu.memory_space<smem>>, %arg2: memref<40x80xbf16, #tpu.memory_space<vmem>>, %arg3: memref<1x80x128xbf16, #tpu.memory_space<vmem>>, %arg4: memref<1x1x128xf32, #tpu.memory_space<vmem>>, %arg5: memref<40x128xf32, #tpu.memory_space<vmem>>) attributes {dimension_semantics = [#tpu.dimension_semantics<parallel>], iteration_bounds = array<i64: 10>, scalar_prefetch = 1 : i64, scratch_operands = 0 : i64, tpu.core_type = #tpu.core_type<tc>, window_params = [{transform_indices = @transform_0, window_bounds = array<i64: 40, 80>}, {transform_indices = @transform_1, window_bounds = array<i64: 1, 80, 128>}, {transform_indices = @transform_2, window_bounds = array<i64: 1, 1, 128>}, {transform_indices = @transform_3, window_bounds = array<i64: 40, 128>}]} {
    %c0 = arith.constant 0 : index
    %c0_0 = arith.constant 0 : index
    %0 = vector.load %arg2[%c0, %c0_0] : memref<40x80xbf16, #tpu.memory_space<vmem>>, vector<40x80xbf16>
    %c0_1 = arith.constant 0 : index
    %c0_2 = arith.constant 0 : index
    %c0_3 = arith.constant 0 : index
    %1 = vector.load %arg3[%c0_1, %c0_2, %c0_3] : memref<1x80x128xbf16, #tpu.memory_space<vmem>>, vector<1x80x128xbf16>
    %2 = vector.shape_cast %1 : vector<1x80x128xbf16> to vector<80x128xbf16>
    %cst = arith.constant dense<0.000000e+00> : vector<40x128xf32>
    %3 = tpu.matmul %0, %2, %cst {dimension_numbers = #tpu.dot_dimension_numbers<[1], [0], [0], [1], [0, 0, 1, 1], [], []>} : vector<40x80xbf16>, vector<80x128xbf16>, vector<40x128xf32> -> vector<40x128xf32>
    %c0_4 = arith.constant 0 : index
    %c0_5 = arith.constant 0 : index
    %c0_6 = arith.constant 0 : index
    %4 = vector.load %arg4[%c0_4, %c0_5, %c0_6] : memref<1x1x128xf32, #tpu.memory_space<vmem>>, vector<1x1x128xf32>
    %5 = vector.shape_cast %4 : vector<1x1x128xf32> to vector<1x128xf32>
    %6 = vector.broadcast %5 : vector<1x128xf32> to vector<40x128xf32>
    %7 = arith.addf %3, %6 : vector<40x128xf32>
    %cst_7 = arith.constant 0.000000e+00 : f32
    %8 = vector.broadcast %cst_7 : f32 to vector<40x128xf32>
    %9 = arith.cmpf oge, %7, %8 : vector<40x128xf32>
    %cst_8 = arith.constant 1.000000e-01 : f32
    %10 = vector.broadcast %cst_8 : f32 to vector<40x128xf32>
    %11 = arith.mulf %7, %10 : vector<40x128xf32>
    %12 = arith.select %9, %7, %11 : vector<40x128xi1>, vector<40x128xf32>
    %c0_9 = arith.constant 0 : index
    %c0_10 = arith.constant 0 : index
    %13 = vector.load %arg5[%c0_9, %c0_10] : memref<40x128xf32, #tpu.memory_space<vmem>>, vector<40x128xf32>
    tpu.vector_store %arg5[%c0_9, %c0_10], %12 {strides = array<i32>} : memref<40x128xf32, #tpu.memory_space<vmem>>, vector<40x128xf32>,
    return
  }
  func.func @transform_0(%arg0: i32, %arg1: memref<10xi32, #tpu.memory_space<smem>>) -> (i32, i32) {
    %c0_i32 = arith.constant 0 : i32
    %c0_i32_0 = arith.constant 0 : i32
    return %arg0, %c0_i32 : i32, i32
  }
  func.func @transform_1(%arg0: i32, %arg1: memref<10xi32, #tpu.memory_space<smem>>) -> (i32, i32, i32) {
    %0 = arith.index_cast %arg0 : i32 to index
    %1 = memref.load %arg1[%0] : memref<10xi32, #tpu.memory_space<smem>>
    %c0_i32 = arith.constant 0 : i32
    %c0_i32_0 = arith.constant 0 : i32
    %c0_i32_1 = arith.constant 0 : i32
    return %1, %c0_i32, %c0_i32_0 : i32, i32, i32
  }
  func.func @transform_2(%arg0: i32, %arg1: memref<10xi32, #tpu.memory_space<smem>>) -> (i32, i32, i32) {
    %0 = arith.index_cast %arg0 : i32 to index
    %1 = memref.load %arg1[%0] : memref<10xi32, #tpu.memory_space<smem>>
    %c0_i32 = arith.constant 0 : i32
    %c0_i32_0 = arith.constant 0 : i32
    %c0_i32_1 = arith.constant 0 : i32
    return %1, %c0_i32, %c0_i32_0 : i32, i32, i32
  }
  func.func @transform_3(%arg0: i32, %arg1: memref<10xi32, #tpu.memory_space<smem>>) -> (i32, i32) {
    %c0_i32 = arith.constant 0 : i32
    %c0_i32_0 = arith.constant 0 : i32
    return %arg0, %c0_i32 : i32, i32
  }
}

module attributes {stable_mosaic.version = 11 : i64} {
  func.func @_mm_bias_act_kernel(%arg0: i32, %arg1: memref<10xi32, #tpu.memory_space<smem>>, %arg2: memref<16x160xbf16, #tpu.memory_space<vmem>>, %arg3: memref<1x160x128xbf16, #tpu.memory_space<vmem>>, %arg4: memref<1x1x128xf32, #tpu.memory_space<vmem>>, %arg5: memref<16x128xf32, #tpu.memory_space<vmem>>) attributes {dimension_semantics = [#tpu.dimension_semantics<parallel>], iteration_bounds = array<i64: 10>, scalar_prefetch = 1 : i64, scratch_operands = 0 : i64, tpu.core_type = #tpu.core_type<tc>, window_params = [{transform_indices = @transform_0, window_bounds = array<i64: 16, 160>}, {transform_indices = @transform_1, window_bounds = array<i64: 1, 160, 128>}, {transform_indices = @transform_2, window_bounds = array<i64: 1, 1, 128>}, {transform_indices = @transform_3, window_bounds = array<i64: 16, 128>}]} {
    %c0 = arith.constant 0 : index
    %c0_0 = arith.constant 0 : index
    %0 = vector.load %arg2[%c0, %c0_0] : memref<16x160xbf16, #tpu.memory_space<vmem>>, vector<16x160xbf16>
    %c0_1 = arith.constant 0 : index
    %c0_2 = arith.constant 0 : index
    %c0_3 = arith.constant 0 : index
    %1 = vector.load %arg3[%c0_1, %c0_2, %c0_3] : memref<1x160x128xbf16, #tpu.memory_space<vmem>>, vector<1x160x128xbf16>
    %2 = vector.shape_cast %1 : vector<1x160x128xbf16> to vector<160x128xbf16>
    %cst = arith.constant dense<0.000000e+00> : vector<16x128xf32>
    %3 = tpu.matmul %0, %2, %cst {dimension_numbers = #tpu.dot_dimension_numbers<[1], [0], [0], [1], [0, 0, 1, 1], [], []>} : vector<16x160xbf16>, vector<160x128xbf16>, vector<16x128xf32> -> vector<16x128xf32>
    %c0_4 = arith.constant 0 : index
    %c0_5 = arith.constant 0 : index
    %c0_6 = arith.constant 0 : index
    %4 = vector.load %arg4[%c0_4, %c0_5, %c0_6] : memref<1x1x128xf32, #tpu.memory_space<vmem>>, vector<1x1x128xf32>
    %5 = vector.shape_cast %4 : vector<1x1x128xf32> to vector<1x128xf32>
    %6 = vector.broadcast %5 : vector<1x128xf32> to vector<16x128xf32>
    %7 = arith.addf %3, %6 : vector<16x128xf32>
    %cst_7 = arith.constant 0.000000e+00 : f32
    %8 = vector.broadcast %cst_7 : f32 to vector<16x128xf32>
    %9 = arith.cmpf oge, %7, %8 : vector<16x128xf32>
    %cst_8 = arith.constant 1.000000e-01 : f32
    %10 = vector.broadcast %cst_8 : f32 to vector<16x128xf32>
    %11 = arith.mulf %7, %10 : vector<16x128xf32>
    %12 = arith.select %9, %7, %11 : vector<16x128xi1>, vector<16x128xf32>
    %c0_9 = arith.constant 0 : index
    %c0_10 = arith.constant 0 : index
    %13 = vector.load %arg5[%c0_9, %c0_10] : memref<16x128xf32, #tpu.memory_space<vmem>>, vector<16x128xf32>
    tpu.vector_store %arg5[%c0_9, %c0_10], %12 {strides = array<i32>} : memref<16x128xf32, #tpu.memory_space<vmem>>, vector<16x128xf32>,
    return
  }
  func.func @transform_0(%arg0: i32, %arg1: memref<10xi32, #tpu.memory_space<smem>>) -> (i32, i32) {
    %c0_i32 = arith.constant 0 : i32
    %c0_i32_0 = arith.constant 0 : i32
    return %arg0, %c0_i32 : i32, i32
  }
  func.func @transform_1(%arg0: i32, %arg1: memref<10xi32, #tpu.memory_space<smem>>) -> (i32, i32, i32) {
    %0 = arith.index_cast %arg0 : i32 to index
    %1 = memref.load %arg1[%0] : memref<10xi32, #tpu.memory_space<smem>>
    %c0_i32 = arith.constant 0 : i32
    %c0_i32_0 = arith.constant 0 : i32
    %c0_i32_1 = arith.constant 0 : i32
    return %1, %c0_i32, %c0_i32_0 : i32, i32, i32
  }
  func.func @transform_2(%arg0: i32, %arg1: memref<10xi32, #tpu.memory_space<smem>>) -> (i32, i32, i32) {
    %0 = arith.index_cast %arg0 : i32 to index
    %1 = memref.load %arg1[%0] : memref<10xi32, #tpu.memory_space<smem>>
    %c0_i32 = arith.constant 0 : i32
    %c0_i32_0 = arith.constant 0 : i32
    %c0_i32_1 = arith.constant 0 : i32
    return %1, %c0_i32, %c0_i32_0 : i32, i32, i32
  }
  func.func @transform_3(%arg0: i32, %arg1: memref<10xi32, #tpu.memory_space<smem>>) -> (i32, i32) {
    %c0_i32 = arith.constant 0 : i32
    %c0_i32_0 = arith.constant 0 : i32
    return %arg0, %c0_i32 : i32, i32
  }
}

module attributes {stable_mosaic.version = 11 : i64} {
  func.func @_mm_bias_act_kernel(%arg0: i32, %arg1: memref<9xi32, #tpu.memory_space<smem>>, %arg2: memref<8x160xbf16, #tpu.memory_space<vmem>>, %arg3: memref<1x160x128xbf16, #tpu.memory_space<vmem>>, %arg4: memref<1x1x128xf32, #tpu.memory_space<vmem>>, %arg5: memref<8x128xf32, #tpu.memory_space<vmem>>) attributes {dimension_semantics = [#tpu.dimension_semantics<parallel>], iteration_bounds = array<i64: 9>, scalar_prefetch = 1 : i64, scratch_operands = 0 : i64, tpu.core_type = #tpu.core_type<tc>, window_params = [{transform_indices = @transform_0, window_bounds = array<i64: 8, 160>}, {transform_indices = @transform_1, window_bounds = array<i64: 1, 160, 128>}, {transform_indices = @transform_2, window_bounds = array<i64: 1, 1, 128>}, {transform_indices = @transform_3, window_bounds = array<i64: 8, 128>}]} {
    %c0 = arith.constant 0 : index
    %c0_0 = arith.constant 0 : index
    %0 = vector.load %arg2[%c0, %c0_0] : memref<8x160xbf16, #tpu.memory_space<vmem>>, vector<8x160xbf16>
    %c0_1 = arith.constant 0 : index
    %c0_2 = arith.constant 0 : index
    %c0_3 = arith.constant 0 : index
    %1 = vector.load %arg3[%c0_1, %c0_2, %c0_3] : memref<1x160x128xbf16, #tpu.memory_space<vmem>>, vector<1x160x128xbf16>
    %2 = vector.shape_cast %1 : vector<1x160x128xbf16> to vector<160x128xbf16>
    %cst = arith.constant dense<0.000000e+00> : vector<8x128xf32>
    %3 = tpu.matmul %0, %2, %cst {dimension_numbers = #tpu.dot_dimension_numbers<[1], [0], [0], [1], [0, 0, 1, 1], [], []>} : vector<8x160xbf16>, vector<160x128xbf16>, vector<8x128xf32> -> vector<8x128xf32>
    %c0_4 = arith.constant 0 : index
    %c0_5 = arith.constant 0 : index
    %c0_6 = arith.constant 0 : index
    %4 = vector.load %arg4[%c0_4, %c0_5, %c0_6] : memref<1x1x128xf32, #tpu.memory_space<vmem>>, vector<1x1x128xf32>
    %5 = vector.shape_cast %4 : vector<1x1x128xf32> to vector<1x128xf32>
    %6 = vector.broadcast %5 : vector<1x128xf32> to vector<8x128xf32>
    %7 = arith.addf %3, %6 : vector<8x128xf32>
    %cst_7 = arith.constant 0.000000e+00 : f32
    %8 = vector.broadcast %cst_7 : f32 to vector<8x128xf32>
    %9 = arith.cmpf oge, %7, %8 : vector<8x128xf32>
    %cst_8 = arith.constant 1.000000e-01 : f32
    %10 = vector.broadcast %cst_8 : f32 to vector<8x128xf32>
    %11 = arith.mulf %7, %10 : vector<8x128xf32>
    %12 = arith.select %9, %7, %11 : vector<8x128xi1>, vector<8x128xf32>
    %c0_9 = arith.constant 0 : index
    %c0_10 = arith.constant 0 : index
    %13 = vector.load %arg5[%c0_9, %c0_10] : memref<8x128xf32, #tpu.memory_space<vmem>>, vector<8x128xf32>
    tpu.vector_store %arg5[%c0_9, %c0_10], %12 {strides = array<i32>} : memref<8x128xf32, #tpu.memory_space<vmem>>, vector<8x128xf32>,
    return
  }
  func.func @transform_0(%arg0: i32, %arg1: memref<9xi32, #tpu.memory_space<smem>>) -> (i32, i32) {
    %c0_i32 = arith.constant 0 : i32
    %c0_i32_0 = arith.constant 0 : i32
    return %arg0, %c0_i32 : i32, i32
  }
  func.func @transform_1(%arg0: i32, %arg1: memref<9xi32, #tpu.memory_space<smem>>) -> (i32, i32, i32) {
    %0 = arith.index_cast %arg0 : i32 to index
    %1 = memref.load %arg1[%0] : memref<9xi32, #tpu.memory_space<smem>>
    %c0_i32 = arith.constant 0 : i32
    %c0_i32_0 = arith.constant 0 : i32
    %c0_i32_1 = arith.constant 0 : i32
    return %1, %c0_i32, %c0_i32_0 : i32, i32, i32
  }
  func.func @transform_2(%arg0: i32, %arg1: memref<9xi32, #tpu.memory_space<smem>>) -> (i32, i32, i32) {
    %0 = arith.index_cast %arg0 : i32 to index
    %1 = memref.load %arg1[%0] : memref<9xi32, #tpu.memory_space<smem>>
    %c0_i32 = arith.constant 0 : i32
    %c0_i32_0 = arith.constant 0 : i32
    %c0_i32_1 = arith.constant 0 : i32
    return %1, %c0_i32, %c0_i32_0 : i32, i32, i32
  }
  func.func @transform_3(%arg0: i32, %arg1: memref<9xi32, #tpu.memory_space<smem>>) -> (i32, i32) {
    %c0_i32 = arith.constant 0 : i32
    %c0_i32_0 = arith.constant 0 : i32
    return %arg0, %c0_i32 : i32, i32
  }
}

module attributes {stable_mosaic.version = 11 : i64} {
  func.func @_mm_bias_act_kernel(%arg0: i32, %arg1: memref<9xi32, #tpu.memory_space<smem>>, %arg2: memref<8x96xbf16, #tpu.memory_space<vmem>>, %arg3: memref<1x96x128xbf16, #tpu.memory_space<vmem>>, %arg4: memref<1x1x128xf32, #tpu.memory_space<vmem>>, %arg5: memref<8x128xf32, #tpu.memory_space<vmem>>) attributes {dimension_semantics = [#tpu.dimension_semantics<parallel>], iteration_bounds = array<i64: 9>, scalar_prefetch = 1 : i64, scratch_operands = 0 : i64, tpu.core_type = #tpu.core_type<tc>, window_params = [{transform_indices = @transform_0, window_bounds = array<i64: 8, 96>}, {transform_indices = @transform_1, window_bounds = array<i64: 1, 96, 128>}, {transform_indices = @transform_2, window_bounds = array<i64: 1, 1, 128>}, {transform_indices = @transform_3, window_bounds = array<i64: 8, 128>}]} {
    %c0 = arith.constant 0 : index
    %c0_0 = arith.constant 0 : index
    %0 = vector.load %arg2[%c0, %c0_0] : memref<8x96xbf16, #tpu.memory_space<vmem>>, vector<8x96xbf16>
    %c0_1 = arith.constant 0 : index
    %c0_2 = arith.constant 0 : index
    %c0_3 = arith.constant 0 : index
    %1 = vector.load %arg3[%c0_1, %c0_2, %c0_3] : memref<1x96x128xbf16, #tpu.memory_space<vmem>>, vector<1x96x128xbf16>
    %2 = vector.shape_cast %1 : vector<1x96x128xbf16> to vector<96x128xbf16>
    %cst = arith.constant dense<0.000000e+00> : vector<8x128xf32>
    %3 = tpu.matmul %0, %2, %cst {dimension_numbers = #tpu.dot_dimension_numbers<[1], [0], [0], [1], [0, 0, 1, 1], [], []>} : vector<8x96xbf16>, vector<96x128xbf16>, vector<8x128xf32> -> vector<8x128xf32>
    %c0_4 = arith.constant 0 : index
    %c0_5 = arith.constant 0 : index
    %c0_6 = arith.constant 0 : index
    %4 = vector.load %arg4[%c0_4, %c0_5, %c0_6] : memref<1x1x128xf32, #tpu.memory_space<vmem>>, vector<1x1x128xf32>
    %5 = vector.shape_cast %4 : vector<1x1x128xf32> to vector<1x128xf32>
    %6 = vector.broadcast %5 : vector<1x128xf32> to vector<8x128xf32>
    %7 = arith.addf %3, %6 : vector<8x128xf32>
    %c0_7 = arith.constant 0 : index
    %c0_8 = arith.constant 0 : index
    %8 = vector.load %arg5[%c0_7, %c0_8] : memref<8x128xf32, #tpu.memory_space<vmem>>, vector<8x128xf32>
    tpu.vector_store %arg5[%c0_7, %c0_8], %7 {strides = array<i32>} : memref<8x128xf32, #tpu.memory_space<vmem>>, vector<8x128xf32>,
    return
  }
  func.func @transform_0(%arg0: i32, %arg1: memref<9xi32, #tpu.memory_space<smem>>) -> (i32, i32) {
    %c0_i32 = arith.constant 0 : i32
    %c0_i32_0 = arith.constant 0 : i32
    return %arg0, %c0_i32 : i32, i32
  }
  func.func @transform_1(%arg0: i32, %arg1: memref<9xi32, #tpu.memory_space<smem>>) -> (i32, i32, i32) {
    %0 = arith.index_cast %arg0 : i32 to index
    %1 = memref.load %arg1[%0] : memref<9xi32, #tpu.memory_space<smem>>
    %c0_i32 = arith.constant 0 : i32
    %c0_i32_0 = arith.constant 0 : i32
    %c0_i32_1 = arith.constant 0 : i32
    return %1, %c0_i32, %c0_i32_0 : i32, i32, i32
  }
  func.func @transform_2(%arg0: i32, %arg1: memref<9xi32, #tpu.memory_space<smem>>) -> (i32, i32, i32) {
    %0 = arith.index_cast %arg0 : i32 to index
    %1 = memref.load %arg1[%0] : memref<9xi32, #tpu.memory_space<smem>>
    %c0_i32 = arith.constant 0 : i32
    %c0_i32_0 = arith.constant 0 : i32
    %c0_i32_1 = arith.constant 0 : i32
    return %1, %c0_i32, %c0_i32_0 : i32, i32, i32
  }
  func.func @transform_3(%arg0: i32, %arg1: memref<9xi32, #tpu.memory_space<smem>>) -> (i32, i32) {
    %c0_i32 = arith.constant 0 : i32
    %c0_i32_0 = arith.constant 0 : i32
    return %arg0, %c0_i32 : i32, i32
  }
}

</mosaic_0001>

<llo_original>
// kernel: multi_period_discriminator_forward.6
$region0: #{multi_period_discriminator_forward.6}
  #allocation0 [shape = 'u32[]', space=smem, size = 0x4, offset = 0x4, fixed_abs, tag = 'smem constant byte address 0x4 - core index']
  #allocation1 [shape = 'u32[144,128]{1,0:T(1,128)}', space=vmem, size = 0x12000, scoped, tag = 'internal scratch']
  #allocation2 [shape = 's32[1]{0}', space=sflag, size = 0x4, scoped, tag = 'scoped memory for multi_period_discriminator_forward.6']
  #allocation3 [shape = 'u8[512]{0}', space=smem, size = 0x200, scoped, tag = 'prefetched SMEM operand 0']
  %s0 = inlined_call_operand.vmem [shape: s32[10], index: 0, kind: input, shape index: {}]
  %s1 = inlined_call_operand.vmem [shape: bf16[1040,16], index: 1, kind: input, shape index: {}]
  %s2 = inlined_call_operand.vmem [shape: bf16[5,16,128], index: 2, kind: input, shape index: {}]
  %s3 = inlined_call_operand.vmem [shape: f32[5,1,128], index: 3, kind: input, shape index: {}]
  %s4 = inlined_call_operand.vmem [shape: f32[1040,128], index: 4, kind: output, shape index: {}]
  %s5 = sld [smem:[#allocation0]]
  $region45: #{multi_period_discriminator_forward.6} parent=0
    _
  %s7 = ssub.s32 1, %s5
  %s8 = scalar_select 0, %s7, %s5
  %s9 = sshll.u32 %s0, 4
  %s10 = int_to_ptr.vmem [resolvable:$true] %s9
  %12 = dma.vmem_to_smem %s10, 16, [#allocation3], [#allocation2]
  %13 = dma.done [#allocation2], 16
  %14 = sfence
  loop: start=0, step=1, limit=12
  $region2: #{multi_period_discriminator_forward.6} parent=0 // loop_pre_header
    _
  $region3: #{multi_period_discriminator_forward.6} parent=0 // loop_header
    %s16 = sphi 0, %s20
    %p17 = scmp.ge.s32.totalorder %s16, 12
    %s26 = sphi 0, %s28
    %s29 = sphi 0, %s26
    %s30 = sphi 0, %s29
    %s46 = sphi 0, %s30
    %s54 = sphi 0, %s56
    %s57 = sphi 0, %s54
    %s58 = sphi 0, %s57
    %s74 = sphi 0, %s58
    %s82 = sphi 0, %s84
    %s85 = sphi 0, %s82
    %s86 = sphi 0, %s85
    %s102 = sphi 0, %s86
    %s108 = sphi 0, %s110
    %s111 = sphi 0, %s108
    %s112 = sphi 0, %s111
    %s128 = sphi 0, %s112
  $region4: #{multi_period_discriminator_forward.6} parent=0 // loop_header_branch
    %19 = sbr.rel (%p17) target = $region8
  $region5: #{multi_period_discriminator_forward.6} parent=0 // loop_body
    %s21 = ssub.s32 %s16, 1
    %s22 = ssub.s32 %s16, 2
    %s23 = sadd.s32 %s16, 1
    %s24 = ssub.s32 %s16, %s23
    %p25 = scmp.eq.s32.totalorder %s24, 0
    %s27 = sadd.s32 %s26, 1
    %s28 = scalar_select %p25, %s26, %s27
    %p31 = pneg %p25
    %p32 = scmp.eq.s32.totalorder %s16, 9
    %p33 = por %p31, %p32
    %p34 = scmp.ne.s32.totalorder %s26, %s29
    %p35 = scmp.eq.s32.totalorder %s16, 0
    %p36 = por %p34, %p35
    %p37 = scmp.ne.s32.totalorder %s26, %s29
    %p38 = scmp.eq.s32.totalorder %s21, 9
    %p39 = por %p37, %p38
    %p40 = scmp.ne.s32.totalorder %s29, %s30
    %p41 = scmp.eq.s32.totalorder %s21, 0
    %p42 = por %p40, %p41
    %p43 = scmp.ne.s32.totalorder %s29, %s30
    %p44 = scmp.eq.s32.totalorder %s22, 9
    %p45 = por %p43, %p44
    %p47 = scmp.ne.s32.totalorder %s30, %s46
    %p48 = scmp.eq.s32.totalorder %s22, 0
    %p49 = por %p47, %p48
    %s50 = sld [smem:[#allocation3 + %s16]]
    %s51 = sld [smem:[#allocation3 + %s23]]
    %s52 = ssub.s32 %s50, %s51
    %p53 = scmp.eq.s32.totalorder %s52, 0
    %s55 = sadd.s32 %s54, 1
    %s56 = scalar_select %p53, %s54, %s55
    %p59 = pneg %p53
    %p60 = scmp.eq.s32.totalorder %s16, 9
    %p61 = por %p59, %p60
    %p62 = scmp.ne.s32.totalorder %s54, %s57
    %p63 = scmp.eq.s32.totalorder %s16, 0
    %p64 = por %p62, %p63
    %p65 = scmp.ne.s32.totalorder %s54, %s57
    %p66 = scmp.eq.s32.totalorder %s21, 9
    %p67 = por %p65, %p66
    %p68 = scmp.ne.s32.totalorder %s57, %s58
    %p69 = scmp.eq.s32.totalorder %s21, 0
    %p70 = por %p68, %p69
    %p71 = scmp.ne.s32.totalorder %s57, %s58
    %p72 = scmp.eq.s32.totalorder %s22, 9
    %p73 = por %p71, %p72
    %p75 = scmp.ne.s32.totalorder %s58, %s74
    %p76 = scmp.eq.s32.totalorder %s22, 0
    %p77 = por %p75, %p76
    %s78 = sld [smem:[#allocation3 + %s16]]
    %s79 = sld [smem:[#allocation3 + %s23]]
    %s80 = ssub.s32 %s78, %s79
    %p81 = scmp.eq.s32.totalorder %s80, 0
    %s83 = sadd.s32 %s82, 1
    %s84 = scalar_select %p81, %s82, %s83
    %p87 = pneg %p81
    %p88 = scmp.eq.s32.totalorder %s16, 9
    %p89 = por %p87, %p88
    %p90 = scmp.ne.s32.totalorder %s82, %s85
    %p91 = scmp.eq.s32.totalorder %s16, 0
    %p92 = por %p90, %p91
    %p93 = scmp.ne.s32.totalorder %s82, %s85
    %p94 = scmp.eq.s32.totalorder %s21, 9
    %p95 = por %p93, %p94
    %p96 = scmp.ne.s32.totalorder %s85, %s86
    %p97 = scmp.eq.s32.totalorder %s21, 0
    %p98 = por %p96, %p97
    %p99 = scmp.ne.s32.totalorder %s85, %s86
    %p100 = scmp.eq.s32.totalorder %s22, 9
    %p101 = por %p99, %p100
    %p103 = scmp.ne.s32.totalorder %s86, %s102
    %p104 = scmp.eq.s32.totalorder %s22, 0
    %p105 = por %p103, %p104
    %s106 = ssub.s32 %s16, %s23
    %p107 = scmp.eq.s32.totalorder %s106, 0
    %s109 = sadd.s32 %s108, 1
    %s110 = scalar_select %p107, %s108, %s109
    %p113 = pneg %p107
    %p114 = scmp.eq.s32.totalorder %s16, 9
    %p115 = por %p113, %p114
    %p116 = scmp.ne.s32.totalorder %s108, %s111
    %p117 = scmp.eq.s32.totalorder %s16, 0
    %p118 = por %p116, %p117
    %p119 = scmp.ne.s32.totalorder %s108, %s111
    %p120 = scmp.eq.s32.totalorder %s21, 9
    %p121 = por %p119, %p120
    %p122 = scmp.ne.s32.totalorder %s111, %s112
    %p123 = scmp.eq.s32.totalorder %s21, 0
    %p124 = por %p122, %p123
    %p125 = scmp.ne.s32.totalorder %s111, %s112
    %p126 = scmp.eq.s32.totalorder %s22, 9
    %p127 = por %p125, %p126
    %p129 = scmp.ne.s32.totalorder %s112, %s128
    %p130 = scmp.eq.s32.totalorder %s22, 0
    %p131 = por %p129, %p130
    %p132 = scmp.le.s32.totalorder 1, %s16
    %p133 = scmp.lt.s32.totalorder %s16, 11
    %p134 = pnand %p132, %p133
    %p135 = pneg %p134
    // Predicated region
    $region9: #{multi_period_discriminator_forward.6} parent=5 // pred_check
      _
    $region10: #{multi_period_discriminator_forward.6} parent=5 // pred_check_branch
      %137 = sbr.rel (%p134) target = $region12
    $region11: #{multi_period_discriminator_forward.6} parent=5 // pred_region
      %s138 = ssub.s32 %s16, 1
    $region12: #{multi_period_discriminator_forward.6} parent=5 // pred_fallthru
      _
    %p139 = scmp.lt.s32.totalorder %s16, 10
    // Predicated region
    $region13: #{multi_period_discriminator_forward.6} parent=5 // pred_check
      %p140 = pneg %p139
    $region14: #{multi_period_discriminator_forward.6} parent=5 // pred_check_branch
      %142 = sbr.rel (%p140) target = $region16
    $region15: #{multi_period_discriminator_forward.6} parent=5 // pred_region
      // Predicated region
      $region17: #{multi_period_discriminator_forward.6} parent=15 // pred_check
        %p143 = pneg %p36
      $region18: #{multi_period_discriminator_forward.6} parent=15 // pred_check_branch
        %145 = sbr.rel (%p143) target = $region20
      $region19: #{multi_period_discriminator_forward.6} parent=15 // pred_region
        %s146 = smul.u32 13, %s16
        %p147 = scmp.lt.s32.totalorder %s146, 129
        %s148 = scalar_select %p147, %s146, 129
        %s149 = smul.addr %s148, 4
        %s150 = scalar_lea.vmem %s1, %s149
        %s151 = smul.u32 13, %s16
      $region20: #{multi_period_discriminator_forward.6} parent=15 // pred_fallthru
        _
      // Predicated region
      $region21: #{multi_period_discriminator_forward.6} parent=15 // pred_check
        %p152 = pneg %p64
      $region22: #{multi_period_discriminator_forward.6} parent=15 // pred_check_branch
        %154 = sbr.rel (%p152) target = $region24
      $region23: #{multi_period_discriminator_forward.6} parent=15 // pred_region
        %s155 = sld [smem:[#allocation3 + %s16]]
        %p156 = scmp.lt.s32.totalorder %s155, 4
        %s157 = scalar_select %p156, %s155, 4
        %s158 = smul.addr %s157, 2
        %s159 = smul.addr %s158, 4
        %s160 = scalar_lea.vmem %s2, %s159
        %s161 = sld [smem:[#allocation3 + %s16]]
      $region24: #{multi_period_discriminator_forward.6} parent=15 // pred_fallthru
        _
      // Predicated region
      $region25: #{multi_period_discriminator_forward.6} parent=15 // pred_check
        %p162 = pneg %p92
      $region26: #{multi_period_discriminator_forward.6} parent=15 // pred_check_branch
        %164 = sbr.rel (%p162) target = $region28
      $region27: #{multi_period_discriminator_forward.6} parent=15 // pred_region
        %s165 = sld [smem:[#allocation3 + %s16]]
        %p166 = scmp.lt.s32.totalorder %s165, 4
        %s167 = scalar_select %p166, %s165, 4
        %s168 = scalar_lea.vmem %s3, %s167
        %s169 = sld [smem:[#allocation3 + %s16]]
      $region28: #{multi_period_discriminator_forward.6} parent=15 // pred_fallthru
        _
    $region16: #{multi_period_discriminator_forward.6} parent=5 // pred_fallthru
      _
    %p170 = scmp.le.s32.totalorder 1, %s16
    %p171 = scmp.lt.s32.totalorder %s16, 11
    %p172 = pnand %p170, %p171
    %p173 = pneg %p172
    // Predicated region
    $region29: #{multi_period_discriminator_forward.6} parent=5 // pred_check
      _
    $region30: #{multi_period_discriminator_forward.6} parent=5 // pred_check_branch
      %175 = sbr.rel (%p172) target = $region32
    $region31: #{multi_period_discriminator_forward.6} parent=5 // pred_region
      %s176 = ssub.s32 %s16, 1
      %s177 = smul.u32 13, %s21
      %p178 = scmp.lt.s32.totalorder %s177, 129
      %s179 = scalar_select %p178, %s177, 129
      %s180 = smul.addr %s179, 4
      %s181 = scalar_lea.vmem %s1, %s180
      %p182 = pneg %p42
      %p183 = pneg %p39
      %s184 = sld [smem:[#allocation3 + %s21]]
      %p185 = scmp.lt.s32.totalorder %s184, 4
      %s186 = scalar_select %p185, %s184, 4
      %s187 = smul.addr %s186, 2
      %s188 = smul.addr %s187, 4
      %s189 = scalar_lea.vmem %s2, %s188
      %p190 = pneg %p70
      %p191 = pneg %p67
      %s192 = sld [smem:[#allocation3 + %s21]]
      %p193 = scmp.lt.s32.totalorder %s192, 4
      %s194 = scalar_select %p193, %s192, 4
      %s195 = scalar_lea.vmem %s3, %s194
      %p196 = pneg %p98
      %p197 = pneg %p95
      %p198 = pneg %p124
      %p199 = pneg %p121
      %s200 = smul.u32 13, %s21
      %p201 = scmp.lt.s32.totalorder %s200, 129
      %s202 = scalar_select %p201, %s200, 129
      %s203 = smul.addr %s202, 8
      %s204 = scalar_lea.vmem %s4, %s203
      %s205 = smul.u32 13, %s21
      %p206 = scmp.lt.s32.totalorder %s205, 129
      %s207 = scalar_select %p206, %s205, 129
      %s208 = smul.addr %s207, 4
      %s209 = scalar_lea.vmem %s1, %s208
      %s210 = smul.u32 13, %s21
      %s211 = sld [smem:[#allocation3 + %s21]]
      %p212 = scmp.lt.s32.totalorder %s211, 4
      %s213 = scalar_select %p212, %s211, 4
      %s214 = smul.addr %s213, 2
      %s215 = smul.addr %s214, 4
      %s216 = scalar_lea.vmem %s2, %s215
      %s217 = sld [smem:[#allocation3 + %s21]]
      %s218 = sld [smem:[#allocation3 + %s21]]
      %p219 = scmp.lt.s32.totalorder %s218, 4
      %s220 = scalar_select %p219, %s218, 4
      %s221 = scalar_lea.vmem %s3, %s220
      %s222 = sld [smem:[#allocation3 + %s21]]
      %s223 = smul.u32 13, %s21
      %p224 = scmp.lt.s32.totalorder %s223, 129
      %s225 = scalar_select %p224, %s223, 129
      %s226 = smul.addr %s225, 8
      %s227 = scalar_lea.vmem %s4, %s226
      %s228 = smul.u32 13, %s21
      %v230 = vld [vmem:[%s209] sm:$0xf]
      %v231 = vld [vmem:[%s209 + $0x4] sm:$0xf]
      %v232 = vld [vmem:[%s209 + $0x8] sm:$0xf]
      %v233 = vld [vmem:[%s209 + $0xc] sm:$0xf]
      %v234 = vld [vmem:[%s209 + $0x10] sm:$0xf]
      %v235 = vld [vmem:[%s209 + $0x14] sm:$0xf]
      %v236 = vld [vmem:[%s209 + $0x18] sm:$0xf]
      %v237 = vld [vmem:[%s209 + $0x1c] sm:$0xf]
      %v238 = vld [vmem:[%s209 + $0x20] sm:$0xf]
      %v239 = vld [vmem:[%s209 + $0x24] sm:$0xf]
      %v240 = vld [vmem:[%s209 + $0x28] sm:$0xf]
      %v241 = vld [vmem:[%s209 + $0x2c] sm:$0xf]
      %v242 = vld [vmem:[%s209 + $0x30] sm:$0xf]
      %v243 = vld [vmem:[%s216] sm:$0xf]
      %v244 = vld [vmem:[%s216 + $0x4] sm:$0xf]
      %v245 = vld [vmem:[%s221] sm:$0x1]
      %v247 = vlaneseq
      %v248 = vshrl.u32 %v247, 7
      %v249 = vsub.s32 0, %v248
      %v250 = vrot.slane %v245, %v249
      %v265 = vunpack.c.l.b16 %v230
      %v266 = vunpack.c.l.b16 %v231
      %v267 = vunpack.c.l.b16 %v232
      %v268 = vunpack.c.l.b16 %v233
      %v269 = vunpack.c.l.b16 %v234
      %v270 = vunpack.c.l.b16 %v235
      %v271 = vunpack.c.l.b16 %v236
      %v272 = vunpack.c.l.b16 %v237
      %v273 = vunpack.c.l.b16 %v238
      %v274 = vunpack.c.l.b16 %v239
      %v275 = vunpack.c.l.b16 %v240
      %v276 = vunpack.c.l.b16 %v241
      %v277 = vunpack.c.l.b16 %v242
      %v278 = vpack.c.b16 %v266, %v265
      %v279 = vpack.c.b16 %v268, %v267
      %v280 = vpack.c.b16 %v270, %v269
      %v281 = vpack.c.b16 %v272, %v271
      %v282 = vpack.c.b16 %v274, %v273
      %v283 = vpack.c.b16 %v276, %v275
      %v284 = vpack.c.b16 %v277, %v277
      %v287 = vunpack.c.l.b16 %v243
      %v288 = vunpack.c.l.b16 %v244
      %v289 = vpack.c.b16 %v288, %v287
      %vm291 = vcmask 130048
      %v293 = vsel %vm291, %v278, 0
      %v296 = vsel %vm291, %v279, 0
      %v299 = vsel %vm291, %v280, 0
      %v302 = vsel %vm291, %v281, 0
      %v305 = vsel %vm291, %v282, 0
      %v308 = vsel %vm291, %v283, 0
      %v311 = vsel %vm291, %v284, 0
      %313 = vmatprep.subr.bf16.mxu0 0
      %314 = vmatpush1.bf16.msra.mxu0 %v289
      %315 = vmatprep.subr.bf16.mxu0 0
      %316 = vmatpush1.bf16.msra.mxu0 0
      %317 = vmatprep.subr.bf16.mxu0 0
      %318 = vmatpush1.bf16.msra.mxu0 0
      %319 = vmatprep.subr.bf16.mxu0 0
      %320 = vmatpush1.bf16.msra.mxu0 0
      %321 = vmatprep.subr.bf16.mxu0 0
      %322 = vmatpush1.bf16.msra.mxu0 0
      %323 = vmatprep.subr.bf16.mxu0 0
      %324 = vmatpush1.bf16.msra.mxu0 0
      %325 = vmatprep.subr.bf16.mxu0 0
      %326 = vmatpush1.bf16.msra.mxu0 0
      %327 = vmatprep.subr.bf16.mxu0 0
      %328 = vmatpush1.bf16.msra.mxu0 0
      %329 = vmatprep.subr.bf16.mxu0 0
      %330 = vmatpush1.bf16.msra.mxu0 0
      %331 = vmatprep.subr.bf16.mxu0 0
      %332 = vmatpush1.bf16.msra.mxu0 0
      %333 = vmatprep.subr.bf16.mxu0 0
      %334 = vmatpush1.bf16.msra.mxu0 0
      %335 = vmatprep.subr.bf16.mxu0 0
      %336 = vmatpush1.bf16.msra.mxu0 0
      %337 = vmatprep.subr.bf16.mxu0 0
      %338 = vmatpush1.bf16.msra.mxu0 0
      %339 = vmatprep.subr.bf16.mxu0 0
      %340 = vmatpush1.bf16.msra.mxu0 0
      %341 = vmatprep.subr.bf16.mxu0 0
      %342 = vmatpush1.bf16.msra.mxu0 0
      %343 = vmatprep.subr.bf16.mxu0 0
      %344 = vmatpush1.bf16.msra.mxu0 0
      %345 = vmatprep.mubr.bf16.mxu0 0
      %346 = vmatmul.mubr.bf16.gmra.mrb[0].mxu0 %v293
      %v347 = vpop.f32.mrb[0].mxu0
      %v348 = vadd.f32 %v250, %v347
      %v349 = vpop.f32.mrb[0].mxu0
      %v350 = vpop.f32.mrb[0].mxu0
      %v351 = vadd.f32 %v250, %v350
      %v352 = vpop.f32.mrb[0].mxu0
      %353 = vmatprep.mubr.bf16.mxu0 0
      %354 = vmatmul.mubr.bf16.gmra.mrb[0].mxu0 %v296
      %v355 = vpop.f32.mrb[0].mxu0
      %v356 = vadd.f32 %v250, %v355
      %v357 = vpop.f32.mrb[0].mxu0
      %v358 = vpop.f32.mrb[0].mxu0
      %v359 = vadd.f32 %v250, %v358
      %v360 = vpop.f32.mrb[0].mxu0
      %361 = vmatprep.mubr.bf16.mxu0 0
      %362 = vmatmul.mubr.bf16.gmra.mrb[0].mxu0 %v299
      %v363 = vpop.f32.mrb[0].mxu0
      %v364 = vadd.f32 %v250, %v363
      %v365 = vpop.f32.mrb[0].mxu0
      %v366 = vpop.f32.mrb[0].mxu0
      %v367 = vadd.f32 %v250, %v366
      %v368 = vpop.f32.mrb[0].mxu0
      %369 = vmatprep.mubr.bf16.mxu0 0
      %370 = vmatmul.mubr.bf16.gmra.mrb[0].mxu0 %v302
      %v371 = vpop.f32.mrb[0].mxu0
      %v372 = vadd.f32 %v250, %v371
      %v373 = vpop.f32.mrb[0].mxu0
      %v374 = vpop.f32.mrb[0].mxu0
      %v375 = vadd.f32 %v250, %v374
      %v376 = vpop.f32.mrb[0].mxu0
      %377 = vmatprep.mubr.bf16.mxu0 0
      %378 = vmatmul.mubr.bf16.gmra.mrb[0].mxu0 %v305
      %v379 = vpop.f32.mrb[0].mxu0
      %v380 = vadd.f32 %v250, %v379
      %v381 = vpop.f32.mrb[0].mxu0
      %v382 = vpop.f32.mrb[0].mxu0
      %v383 = vadd.f32 %v250, %v382
      %v384 = vpop.f32.mrb[0].mxu0
      %385 = vmatprep.mubr.bf16.mxu0 0
      %386 = vmatmul.mubr.bf16.gmra.mrb[0].mxu0 %v308
      %v387 = vpop.f32.mrb[0].mxu0
      %v388 = vadd.f32 %v250, %v387
      %v389 = vpop.f32.mrb[0].mxu0
      %v390 = vpop.f32.mrb[0].mxu0
      %v391 = vadd.f32 %v250, %v390
      %v392 = vpop.f32.mrb[0].mxu0
      %393 = vmatprep.mubr.bf16.mxu0 0
      %394 = vmatmul.mubr.bf16.gmra.mrb[0].mxu0 %v311
      %v395 = vpop.f32.mrb[0].mxu0
      %v396 = vadd.f32 %v250, %v395
      %v397 = vpop.f32.mrb[0].mxu0
      %v398 = vpop.f32.mrb[0].mxu0
      %v399 = vpop.f32.mrb[0].mxu0
      %400 = vdwg.mxu0
      %vm401 = vcmp.ge.f32.partialorder %v348, 0.0
      %vm402 = vcmp.ge.f32.partialorder %v351, 0.0
      %vm403 = vcmp.ge.f32.partialorder %v356, 0.0
      %vm404 = vcmp.ge.f32.partialorder %v359, 0.0
      %vm405 = vcmp.ge.f32.partialorder %v364, 0.0
      %vm406 = vcmp.ge.f32.partialorder %v367, 0.0
      %vm407 = vcmp.ge.f32.partialorder %v372, 0.0
      %vm408 = vcmp.ge.f32.partialorder %v375, 0.0
      %vm409 = vcmp.ge.f32.partialorder %v380, 0.0
      %vm410 = vcmp.ge.f32.partialorder %v383, 0.0
      %vm411 = vcmp.ge.f32.partialorder %v388, 0.0
      %vm412 = vcmp.ge.f32.partialorder %v391, 0.0
      %vm413 = vcmp.ge.f32.partialorder %v396, 0.0
      %v414 = vmul.f32 %v348, 0.1
      %v415 = vmul.f32 %v351, 0.1
      %v416 = vmul.f32 %v356, 0.1
      %v417 = vmul.f32 %v359, 0.1
      %v418 = vmul.f32 %v364, 0.1
      %v419 = vmul.f32 %v367, 0.1
      %v420 = vmul.f32 %v372, 0.1
      %v421 = vmul.f32 %v375, 0.1
      %v422 = vmul.f32 %v380, 0.1
      %v423 = vmul.f32 %v383, 0.1
      %v424 = vmul.f32 %v388, 0.1
      %v425 = vmul.f32 %v391, 0.1
      %v426 = vmul.f32 %v396, 0.1
      %v427 = vsel %vm401, %v348, %v414
      %v428 = vsel %vm402, %v351, %v415
      %v429 = vsel %vm403, %v356, %v416
      %v430 = vsel %vm404, %v359, %v417
      %v431 = vsel %vm405, %v364, %v418
      %v432 = vsel %vm406, %v367, %v419
      %v433 = vsel %vm407, %v372, %v420
      %v434 = vsel %vm408, %v375, %v421
      %v435 = vsel %vm409, %v380, %v422
      %v436 = vsel %vm410, %v383, %v423
      %v437 = vsel %vm411, %v388, %v424
      %v438 = vsel %vm412, %v391, %v425
      %v439 = vsel %vm413, %v396, %v426
      %440 = vst [vmem:[%s227] sm:$0xff] %v427
      %441 = vst [vmem:[%s227 + $0x8] sm:$0xff] %v428
      %442 = vst [vmem:[%s227 + $0x10] sm:$0xff] %v429
      %443 = vst [vmem:[%s227 + $0x18] sm:$0xff] %v430
      %444 = vst [vmem:[%s227 + $0x20] sm:$0xff] %v431
      %445 = vst [vmem:[%s227 + $0x28] sm:$0xff] %v432
      %446 = vst [vmem:[%s227 + $0x30] sm:$0xff] %v433
      %447 = vst [vmem:[%s227 + $0x38] sm:$0xff] %v434
      %448 = vst [vmem:[%s227 + $0x40] sm:$0xff] %v435
      %449 = vst [vmem:[%s227 + $0x48] sm:$0xff] %v436
      %450 = vst [vmem:[%s227 + $0x50] sm:$0xff] %v437
      %451 = vst [vmem:[%s227 + $0x58] sm:$0xff] %v438
      %452 = vst [vmem:[%s227 + $0x60] sm:$0xff] %v439
      %s453 = smul.u32 13, %s21
      %p454 = scmp.lt.s32.totalorder %s453, 129
      %s455 = scalar_select %p454, %s453, 129
      %s456 = smul.addr %s455, 8
      %s457 = scalar_lea.vmem %s4, %s456
      // Predicated region
      $region33: #{multi_period_discriminator_forward.6} parent=31 // pred_check
        %p458 = pneg %p121
      $region34: #{multi_period_discriminator_forward.6} parent=31 // pred_check_branch
        %460 = sbr.rel (%p458) target = $region36
      $region35: #{multi_period_discriminator_forward.6} parent=31 // pred_region
        %s461 = smul.u32 13, %s21
      $region36: #{multi_period_discriminator_forward.6} parent=31 // pred_fallthru
        _
    $region32: #{multi_period_discriminator_forward.6} parent=5 // pred_fallthru
      _
    %p462 = scmp.le.s32.totalorder 2, %s16
    // Predicated region
    $region37: #{multi_period_discriminator_forward.6} parent=5 // pred_check
      %p463 = pneg %p462
    $region38: #{multi_period_discriminator_forward.6} parent=5 // pred_check_branch
      %465 = sbr.rel (%p463) target = $region40
    $region39: #{multi_period_discriminator_forward.6} parent=5 // pred_region
      %s466 = ssub.s32 %s16, 2
      // Predicated region
      $region41: #{multi_period_discriminator_forward.6} parent=39 // pred_check
        %p467 = pneg %p127
      $region42: #{multi_period_discriminator_forward.6} parent=39 // pred_check_branch
        %469 = sbr.rel (%p467) target = $region44
      $region43: #{multi_period_discriminator_forward.6} parent=39 // pred_region
        %s470 = smul.u32 13, %s22
        %p471 = scmp.lt.s32.totalorder %s470, 129
        %s472 = scalar_select %p471, %s470, 129
        %s473 = smul.addr %s472, 8
        %s474 = scalar_lea.vmem %s4, %s473
      $region44: #{multi_period_discriminator_forward.6} parent=39 // pred_fallthru
        _
    $region40: #{multi_period_discriminator_forward.6} parent=5 // pred_fallthru
      _
  $region6: #{multi_period_discriminator_forward.6} parent=0 // loop_footer
    %s20 = sadd.s32 1, %s16
  $region7: #{multi_period_discriminator_forward.6} parent=0 // loop_footer_branch
    %15 = sbr.rel target = $region3
  $region8: #{multi_period_discriminator_forward.6} parent=0 // loop_exit
    _

// kernel: multi_period_discriminator_forward.7
$region0: #{multi_period_discriminator_forward.7}
  #allocation0 [shape = 'u32[]', space=smem, size = 0x4, offset = 0x4, fixed_abs, tag = 'smem constant byte address 0x4 - core index']
  #allocation1 [shape = 'u32[144,128]{1,0:T(1,128)}', space=vmem, size = 0x12000, scoped, tag = 'internal scratch']
  #allocation2 [shape = 's32[1]{0}', space=sflag, size = 0x4, scoped, tag = 'scoped memory for multi_period_discriminator_forward.7']
  #allocation3 [shape = 'u8[512]{0}', space=smem, size = 0x200, scoped, tag = 'prefetched SMEM operand 0']
  %s0 = inlined_call_operand.vmem [shape: s32[10], index: 0, kind: input, shape index: {}]
  %s1 = inlined_call_operand.vmem [shape: bf16[400,80], index: 1, kind: input, shape index: {}]
  %s2 = inlined_call_operand.vmem [shape: bf16[5,80,128], index: 2, kind: input, shape index: {}]
  %s3 = inlined_call_operand.vmem [shape: f32[5,1,128], index: 3, kind: input, shape index: {}]
  %s4 = inlined_call_operand.vmem [shape: f32[400,128], index: 4, kind: output, shape index: {}]
  %s5 = sld [smem:[#allocation0]]
  $region45: #{multi_period_discriminator_forward.7} parent=0
    _
  %s7 = ssub.s32 1, %s5
  %s8 = scalar_select 0, %s7, %s5
  %s9 = sshll.u32 %s0, 4
  %s10 = int_to_ptr.vmem [resolvable:$true] %s9
  %12 = dma.vmem_to_smem %s10, 16, [#allocation3], [#allocation2]
  %13 = dma.done [#allocation2], 16
  %14 = sfence
  loop: start=0, step=1, limit=12
  $region2: #{multi_period_discriminator_forward.7} parent=0 // loop_pre_header
    _
  $region3: #{multi_period_discriminator_forward.7} parent=0 // loop_header
    %s16 = sphi 0, %s20
    %p17 = scmp.ge.s32.totalorder %s16, 12
    %s26 = sphi 0, %s28
    %s29 = sphi 0, %s26
    %s30 = sphi 0, %s29
    %s46 = sphi 0, %s30
    %s54 = sphi 0, %s56
    %s57 = sphi 0, %s54
    %s58 = sphi 0, %s57
    %s74 = sphi 0, %s58
    %s82 = sphi 0, %s84
    %s85 = sphi 0, %s82
    %s86 = sphi 0, %s85
    %s102 = sphi 0, %s86
    %s108 = sphi 0, %s110
    %s111 = sphi 0, %s108
    %s112 = sphi 0, %s111
    %s128 = sphi 0, %s112
  $region4: #{multi_period_discriminator_forward.7} parent=0 // loop_header_branch
    %19 = sbr.rel (%p17) target = $region8
  $region5: #{multi_period_discriminator_forward.7} parent=0 // loop_body
    %s21 = ssub.s32 %s16, 1
    %s22 = ssub.s32 %s16, 2
    %s23 = sadd.s32 %s16, 1
    %s24 = ssub.s32 %s16, %s23
    %p25 = scmp.eq.s32.totalorder %s24, 0
    %s27 = sadd.s32 %s26, 1
    %s28 = scalar_select %p25, %s26, %s27
    %p31 = pneg %p25
    %p32 = scmp.eq.s32.totalorder %s16, 9
    %p33 = por %p31, %p32
    %p34 = scmp.ne.s32.totalorder %s26, %s29
    %p35 = scmp.eq.s32.totalorder %s16, 0
    %p36 = por %p34, %p35
    %p37 = scmp.ne.s32.totalorder %s26, %s29
    %p38 = scmp.eq.s32.totalorder %s21, 9
    %p39 = por %p37, %p38
    %p40 = scmp.ne.s32.totalorder %s29, %s30
    %p41 = scmp.eq.s32.totalorder %s21, 0
    %p42 = por %p40, %p41
    %p43 = scmp.ne.s32.totalorder %s29, %s30
    %p44 = scmp.eq.s32.totalorder %s22, 9
    %p45 = por %p43, %p44
    %p47 = scmp.ne.s32.totalorder %s30, %s46
    %p48 = scmp.eq.s32.totalorder %s22, 0
    %p49 = por %p47, %p48
    %s50 = sld [smem:[#allocation3 + %s16]]
    %s51 = sld [smem:[#allocation3 + %s23]]
    %s52 = ssub.s32 %s50, %s51
    %p53 = scmp.eq.s32.totalorder %s52, 0
    %s55 = sadd.s32 %s54, 1
    %s56 = scalar_select %p53, %s54, %s55
    %p59 = pneg %p53
    %p60 = scmp.eq.s32.totalorder %s16, 9
    %p61 = por %p59, %p60
    %p62 = scmp.ne.s32.totalorder %s54, %s57
    %p63 = scmp.eq.s32.totalorder %s16, 0
    %p64 = por %p62, %p63
    %p65 = scmp.ne.s32.totalorder %s54, %s57
    %p66 = scmp.eq.s32.totalorder %s21, 9
    %p67 = por %p65, %p66
    %p68 = scmp.ne.s32.totalorder %s57, %s58
    %p69 = scmp.eq.s32.totalorder %s21, 0
    %p70 = por %p68, %p69
    %p71 = scmp.ne.s32.totalorder %s57, %s58
    %p72 = scmp.eq.s32.totalorder %s22, 9
    %p73 = por %p71, %p72
    %p75 = scmp.ne.s32.totalorder %s58, %s74
    %p76 = scmp.eq.s32.totalorder %s22, 0
    %p77 = por %p75, %p76
    %s78 = sld [smem:[#allocation3 + %s16]]
    %s79 = sld [smem:[#allocation3 + %s23]]
    %s80 = ssub.s32 %s78, %s79
    %p81 = scmp.eq.s32.totalorder %s80, 0
    %s83 = sadd.s32 %s82, 1
    %s84 = scalar_select %p81, %s82, %s83
    %p87 = pneg %p81
    %p88 = scmp.eq.s32.totalorder %s16, 9
    %p89 = por %p87, %p88
    %p90 = scmp.ne.s32.totalorder %s82, %s85
    %p91 = scmp.eq.s32.totalorder %s16, 0
    %p92 = por %p90, %p91
    %p93 = scmp.ne.s32.totalorder %s82, %s85
    %p94 = scmp.eq.s32.totalorder %s21, 9
    %p95 = por %p93, %p94
    %p96 = scmp.ne.s32.totalorder %s85, %s86
    %p97 = scmp.eq.s32.totalorder %s21, 0
    %p98 = por %p96, %p97
    %p99 = scmp.ne.s32.totalorder %s85, %s86
    %p100 = scmp.eq.s32.totalorder %s22, 9
    %p101 = por %p99, %p100
    %p103 = scmp.ne.s32.totalorder %s86, %s102
    %p104 = scmp.eq.s32.totalorder %s22, 0
    %p105 = por %p103, %p104
    %s106 = ssub.s32 %s16, %s23
    %p107 = scmp.eq.s32.totalorder %s106, 0
    %s109 = sadd.s32 %s108, 1
    %s110 = scalar_select %p107, %s108, %s109
    %p113 = pneg %p107
    %p114 = scmp.eq.s32.totalorder %s16, 9
    %p115 = por %p113, %p114
    %p116 = scmp.ne.s32.totalorder %s108, %s111
    %p117 = scmp.eq.s32.totalorder %s16, 0
    %p118 = por %p116, %p117
    %p119 = scmp.ne.s32.totalorder %s108, %s111
    %p120 = scmp.eq.s32.totalorder %s21, 9
    %p121 = por %p119, %p120
    %p122 = scmp.ne.s32.totalorder %s111, %s112
    %p123 = scmp.eq.s32.totalorder %s21, 0
    %p124 = por %p122, %p123
    %p125 = scmp.ne.s32.totalorder %s111, %s112
    %p126 = scmp.eq.s32.totalorder %s22, 9
    %p127 = por %p125, %p126
    %p129 = scmp.ne.s32.totalorder %s112, %s128
    %p130 = scmp.eq.s32.totalorder %s22, 0
    %p131 = por %p129, %p130
    %p132 = scmp.le.s32.totalorder 1, %s16
    %p133 = scmp.lt.s32.totalorder %s16, 11
    %p134 = pnand %p132, %p133
    %p135 = pneg %p134
    // Predicated region
    $region9: #{multi_period_discriminator_forward.7} parent=5 // pred_check
      _
    $region10: #{multi_period_discriminator_forward.7} parent=5 // pred_check_branch
      %137 = sbr.rel (%p134) target = $region12
    $region11: #{multi_period_discriminator_forward.7} parent=5 // pred_region
      %s138 = ssub.s32 %s16, 1
    $region12: #{multi_period_discriminator_forward.7} parent=5 // pred_fallthru
      _
    %p139 = scmp.lt.s32.totalorder %s16, 10
    // Predicated region
    $region13: #{multi_period_discriminator_forward.7} parent=5 // pred_check
      %p140 = pneg %p139
    $region14: #{multi_period_discriminator_forward.7} parent=5 // pred_check_branch
      %142 = sbr.rel (%p140) target = $region16
    $region15: #{multi_period_discriminator_forward.7} parent=5 // pred_region
      // Predicated region
      $region17: #{multi_period_discriminator_forward.7} parent=15 // pred_check
        %p143 = pneg %p36
      $region18: #{multi_period_discriminator_forward.7} parent=15 // pred_check_branch
        %145 = sbr.rel (%p143) target = $region20
      $region19: #{multi_period_discriminator_forward.7} parent=15 // pred_region
        %s146 = smul.u32 5, %s16
        %p147 = scmp.lt.s32.totalorder %s146, 49
        %s148 = scalar_select %p147, %s146, 49
        %s149 = smul.addr %s148, 4
        %s150 = scalar_lea.vmem %s1, %s149
        %s151 = smul.u32 5, %s16
      $region20: #{multi_period_discriminator_forward.7} parent=15 // pred_fallthru
        _
      // Predicated region
      $region21: #{multi_period_discriminator_forward.7} parent=15 // pred_check
        %p152 = pneg %p64
      $region22: #{multi_period_discriminator_forward.7} parent=15 // pred_check_branch
        %154 = sbr.rel (%p152) target = $region24
      $region23: #{multi_period_discriminator_forward.7} parent=15 // pred_region
        %s155 = sld [smem:[#allocation3 + %s16]]
        %p156 = scmp.lt.s32.totalorder %s155, 4
        %s157 = scalar_select %p156, %s155, 4
        %s158 = smul.addr %s157, 10
        %s159 = smul.addr %s158, 4
        %s160 = scalar_lea.vmem %s2, %s159
        %s161 = sld [smem:[#allocation3 + %s16]]
      $region24: #{multi_period_discriminator_forward.7} parent=15 // pred_fallthru
        _
      // Predicated region
      $region25: #{multi_period_discriminator_forward.7} parent=15 // pred_check
        %p162 = pneg %p92
      $region26: #{multi_period_discriminator_forward.7} parent=15 // pred_check_branch
        %164 = sbr.rel (%p162) target = $region28
      $region27: #{multi_period_discriminator_forward.7} parent=15 // pred_region
        %s165 = sld [smem:[#allocation3 + %s16]]
        %p166 = scmp.lt.s32.totalorder %s165, 4
        %s167 = scalar_select %p166, %s165, 4
        %s168 = scalar_lea.vmem %s3, %s167
        %s169 = sld [smem:[#allocation3 + %s16]]
      $region28: #{multi_period_discriminator_forward.7} parent=15 // pred_fallthru
        _
    $region16: #{multi_period_discriminator_forward.7} parent=5 // pred_fallthru
      _
    %p170 = scmp.le.s32.totalorder 1, %s16
    %p171 = scmp.lt.s32.totalorder %s16, 11
    %p172 = pnand %p170, %p171
    %p173 = pneg %p172
    // Predicated region
    $region29: #{multi_period_discriminator_forward.7} parent=5 // pred_check
      _
    $region30: #{multi_period_discriminator_forward.7} parent=5 // pred_check_branch
      %175 = sbr.rel (%p172) target = $region32
    $region31: #{multi_period_discriminator_forward.7} parent=5 // pred_region
      %s176 = ssub.s32 %s16, 1
      %s177 = smul.u32 5, %s21
      %p178 = scmp.lt.s32.totalorder %s177, 49
      %s179 = scalar_select %p178, %s177, 49
      %s180 = smul.addr %s179, 4
      %s181 = scalar_lea.vmem %s1, %s180
      %p182 = pneg %p42
      %p183 = pneg %p39
      %s184 = sld [smem:[#allocation3 + %s21]]
      %p185 = scmp.lt.s32.totalorder %s184, 4
      %s186 = scalar_select %p185, %s184, 4
      %s187 = smul.addr %s186, 10
      %s188 = smul.addr %s187, 4
      %s189 = scalar_lea.vmem %s2, %s188
      %p190 = pneg %p70
      %p191 = pneg %p67
      %s192 = sld [smem:[#allocation3 + %s21]]
      %p193 = scmp.lt.s32.totalorder %s192, 4
      %s194 = scalar_select %p193, %s192, 4
      %s195 = scalar_lea.vmem %s3, %s194
      %p196 = pneg %p98
      %p197 = pneg %p95
      %p198 = pneg %p124
      %p199 = pneg %p121
      %s200 = smul.u32 5, %s21
      %p201 = scmp.lt.s32.totalorder %s200, 49
      %s202 = scalar_select %p201, %s200, 49
      %s203 = smul.addr %s202, 8
      %s204 = scalar_lea.vmem %s4, %s203
      %s205 = smul.u32 5, %s21
      %p206 = scmp.lt.s32.totalorder %s205, 49
      %s207 = scalar_select %p206, %s205, 49
      %s208 = smul.addr %s207, 4
      %s209 = scalar_lea.vmem %s1, %s208
      %s210 = smul.u32 5, %s21
      %s211 = sld [smem:[#allocation3 + %s21]]
      %p212 = scmp.lt.s32.totalorder %s211, 4
      %s213 = scalar_select %p212, %s211, 4
      %s214 = smul.addr %s213, 10
      %s215 = smul.addr %s214, 4
      %s216 = scalar_lea.vmem %s2, %s215
      %s217 = sld [smem:[#allocation3 + %s21]]
      %s218 = sld [smem:[#allocation3 + %s21]]
      %p219 = scmp.lt.s32.totalorder %s218, 4
      %s220 = scalar_select %p219, %s218, 4
      %s221 = scalar_lea.vmem %s3, %s220
      %s222 = sld [smem:[#allocation3 + %s21]]
      %s223 = smul.u32 5, %s21
      %p224 = scmp.lt.s32.totalorder %s223, 49
      %s225 = scalar_select %p224, %s223, 49
      %s226 = smul.addr %s225, 8
      %s227 = scalar_lea.vmem %s4, %s226
      %s228 = smul.u32 5, %s21
      %v230 = vld [vmem:[%s209] sm:$0xf]
      %v231 = vld [vmem:[%s209 + $0x4] sm:$0xf]
      %v232 = vld [vmem:[%s209 + $0x8] sm:$0xf]
      %v233 = vld [vmem:[%s209 + $0xc] sm:$0xf]
      %v234 = vld [vmem:[%s209 + $0x10] sm:$0xf]
      %v235 = vld [vmem:[%s216] sm:$0xf]
      %v236 = vld [vmem:[%s216 + $0x4] sm:$0xf]
      %v237 = vld [vmem:[%s216 + $0x8] sm:$0xf]
      %v238 = vld [vmem:[%s216 + $0xc] sm:$0xf]
      %v239 = vld [vmem:[%s216 + $0x10] sm:$0xf]
      %v240 = vld [vmem:[%s216 + $0x14] sm:$0xf]
      %v241 = vld [vmem:[%s216 + $0x18] sm:$0xf]
      %v242 = vld [vmem:[%s216 + $0x1c] sm:$0xf]
      %v243 = vld [vmem:[%s216 + $0x20] sm:$0xf]
      %v244 = vld [vmem:[%s216 + $0x24] sm:$0xf]
      %v245 = vld [vmem:[%s221] sm:$0x1]
      %v247 = vlaneseq
      %v248 = vshrl.u32 %v247, 7
      %v249 = vsub.s32 0, %v248
      %v250 = vrot.slane %v245, %v249
      %v257 = vunpack.c.l.b16 %v230
      %v258 = vunpack.c.l.b16 %v231
      %v259 = vunpack.c.l.b16 %v232
      %v260 = vunpack.c.l.b16 %v233
      %v261 = vunpack.c.l.b16 %v234
      %v262 = vpack.c.b16 %v258, %v257
      %v263 = vpack.c.b16 %v260, %v259
      %v264 = vpack.c.b16 %v261, %v261
      %v275 = vunpack.c.l.b16 %v235
      %v276 = vunpack.c.l.b16 %v236
      %v277 = vunpack.c.l.b16 %v237
      %v278 = vunpack.c.l.b16 %v238
      %v279 = vunpack.c.l.b16 %v239
      %v280 = vunpack.c.l.b16 %v240
      %v281 = vunpack.c.l.b16 %v241
      %v282 = vunpack.c.l.b16 %v242
      %v283 = vunpack.c.l.b16 %v243
      %v284 = vunpack.c.l.b16 %v244
      %v285 = vpack.c.b16 %v276, %v275
      %v286 = vpack.c.b16 %v278, %v277
      %v287 = vpack.c.b16 %v280, %v279
      %v288 = vpack.c.b16 %v282, %v281
      %v289 = vpack.c.b16 %v284, %v283
      %vm295 = vcmask 654336
      %v297 = vsel %vm295, %v262, 0
      %v300 = vsel %vm295, %v263, 0
      %v303 = vsel %vm295, %v264, 0
      %305 = vmatprep.subr.bf16.mxu0 0
      %306 = vmatpush1.bf16.msra.mxu0 %v285
      %307 = vmatprep.subr.bf16.mxu0 0
      %308 = vmatpush1.bf16.msra.mxu0 %v286
      %309 = vmatprep.subr.bf16.mxu0 0
      %310 = vmatpush1.bf16.msra.mxu0 %v287
      %311 = vmatprep.subr.bf16.mxu0 0
      %312 = vmatpush1.bf16.msra.mxu0 %v288
      %313 = vmatprep.subr.bf16.mxu0 0
      %314 = vmatpush1.bf16.msra.mxu0 %v289
      %315 = vmatprep.subr.bf16.mxu0 0
      %316 = vmatpush1.bf16.msra.mxu0 0
      %317 = vmatprep.subr.bf16.mxu0 0
      %318 = vmatpush1.bf16.msra.mxu0 0
      %319 = vmatprep.subr.bf16.mxu0 0
      %320 = vmatpush1.bf16.msra.mxu0 0
      %321 = vmatprep.subr.bf16.mxu0 0
      %322 = vmatpush1.bf16.msra.mxu0 0
      %323 = vmatprep.subr.bf16.mxu0 0
      %324 = vmatpush1.bf16.msra.mxu0 0
      %325 = vmatprep.subr.bf16.mxu0 0
      %326 = vmatpush1.bf16.msra.mxu0 0
      %327 = vmatprep.subr.bf16.mxu0 0
      %328 = vmatpush1.bf16.msra.mxu0 0
      %329 = vmatprep.subr.bf16.mxu0 0
      %330 = vmatpush1.bf16.msra.mxu0 0
      %331 = vmatprep.subr.bf16.mxu0 0
      %332 = vmatpush1.bf16.msra.mxu0 0
      %333 = vmatprep.subr.bf16.mxu0 0
      %334 = vmatpush1.bf16.msra.mxu0 0
      %335 = vmatprep.subr.bf16.mxu0 0
      %336 = vmatpush1.bf16.msra.mxu0 0
      %337 = vmatprep.mubr.bf16.mxu0 0
      %338 = vmatmul.mubr.bf16.gmra.mrb[0].mxu0 %v297
      %v339 = vpop.f32.mrb[0].mxu0
      %v340 = vadd.f32 %v250, %v339
      %v341 = vpop.f32.mrb[0].mxu0
      %v342 = vpop.f32.mrb[0].mxu0
      %v343 = vadd.f32 %v250, %v342
      %v344 = vpop.f32.mrb[0].mxu0
      %345 = vmatprep.mubr.bf16.mxu0 0
      %346 = vmatmul.mubr.bf16.gmra.mrb[0].mxu0 %v300
      %v347 = vpop.f32.mrb[0].mxu0
      %v348 = vadd.f32 %v250, %v347
      %v349 = vpop.f32.mrb[0].mxu0
      %v350 = vpop.f32.mrb[0].mxu0
      %v351 = vadd.f32 %v250, %v350
      %v352 = vpop.f32.mrb[0].mxu0
      %353 = vmatprep.mubr.bf16.mxu0 0
      %354 = vmatmul.mubr.bf16.gmra.mrb[0].mxu0 %v303
      %v355 = vpop.f32.mrb[0].mxu0
      %v356 = vadd.f32 %v250, %v355
      %v357 = vpop.f32.mrb[0].mxu0
      %v358 = vpop.f32.mrb[0].mxu0
      %v359 = vpop.f32.mrb[0].mxu0
      %360 = vdwg.mxu0
      %vm361 = vcmp.ge.f32.partialorder %v340, 0.0
      %vm362 = vcmp.ge.f32.partialorder %v343, 0.0
      %vm363 = vcmp.ge.f32.partialorder %v348, 0.0
      %vm364 = vcmp.ge.f32.partialorder %v351, 0.0
      %vm365 = vcmp.ge.f32.partialorder %v356, 0.0
      %v366 = vmul.f32 %v340, 0.1
      %v367 = vmul.f32 %v343, 0.1
      %v368 = vmul.f32 %v348, 0.1
      %v369 = vmul.f32 %v351, 0.1
      %v370 = vmul.f32 %v356, 0.1
      %v371 = vsel %vm361, %v340, %v366
      %v372 = vsel %vm362, %v343, %v367
      %v373 = vsel %vm363, %v348, %v368
      %v374 = vsel %vm364, %v351, %v369
      %v375 = vsel %vm365, %v356, %v370
      %376 = vst [vmem:[%s227] sm:$0xff] %v371
      %377 = vst [vmem:[%s227 + $0x8] sm:$0xff] %v372
      %378 = vst [vmem:[%s227 + $0x10] sm:$0xff] %v373
      %379 = vst [vmem:[%s227 + $0x18] sm:$0xff] %v374
      %380 = vst [vmem:[%s227 + $0x20] sm:$0xff] %v375
      %s381 = smul.u32 5, %s21
      %p382 = scmp.lt.s32.totalorder %s381, 49
      %s383 = scalar_select %p382, %s381, 49
      %s384 = smul.addr %s383, 8
      %s385 = scalar_lea.vmem %s4, %s384
      // Predicated region
      $region33: #{multi_period_discriminator_forward.7} parent=31 // pred_check
        %p386 = pneg %p121
      $region34: #{multi_period_discriminator_forward.7} parent=31 // pred_check_branch
        %388 = sbr.rel (%p386) target = $region36
      $region35: #{multi_period_discriminator_forward.7} parent=31 // pred_region
        %s389 = smul.u32 5, %s21
      $region36: #{multi_period_discriminator_forward.7} parent=31 // pred_fallthru
        _
    $region32: #{multi_period_discriminator_forward.7} parent=5 // pred_fallthru
      _
    %p390 = scmp.le.s32.totalorder 2, %s16
    // Predicated region
    $region37: #{multi_period_discriminator_forward.7} parent=5 // pred_check
      %p391 = pneg %p390
    $region38: #{multi_period_discriminator_forward.7} parent=5 // pred_check_branch
      %393 = sbr.rel (%p391) target = $region40
    $region39: #{multi_period_discriminator_forward.7} parent=5 // pred_region
      %s394 = ssub.s32 %s16, 2
      // Predicated region
      $region41: #{multi_period_discriminator_forward.7} parent=39 // pred_check
        %p395 = pneg %p127
      $region42: #{multi_period_discriminator_forward.7} parent=39 // pred_check_branch
        %397 = sbr.rel (%p395) target = $region44
      $region43: #{multi_period_discriminator_forward.7} parent=39 // pred_region
        %s398 = smul.u32 5, %s22
        %p399 = scmp.lt.s32.totalorder %s398, 49
        %s400 = scalar_select %p399, %s398, 49
        %s401 = smul.addr %s400, 8
        %s402 = scalar_lea.vmem %s4, %s401
      $region44: #{multi_period_discriminator_forward.7} parent=39 // pred_fallthru
        _
    $region40: #{multi_period_discriminator_forward.7} parent=5 // pred_fallthru
      _
  $region6: #{multi_period_discriminator_forward.7} parent=0 // loop_footer
    %s20 = sadd.s32 1, %s16
  $region7: #{multi_period_discriminator_forward.7} parent=0 // loop_footer_branch
    %15 = sbr.rel target = $region3
  $region8: #{multi_period_discriminator_forward.7} parent=0 // loop_exit
    _

// kernel: multi_period_discriminator_forward.8
$region0: #{multi_period_discriminator_forward.8}
  #allocation0 [shape = 'u32[]', space=smem, size = 0x4, offset = 0x4, fixed_abs, tag = 'smem constant byte address 0x4 - core index']
  #allocation1 [shape = 'u32[144,128]{1,0:T(1,128)}', space=vmem, size = 0x12000, scoped, tag = 'internal scratch']
  #allocation2 [shape = 's32[1]{0}', space=sflag, size = 0x4, scoped, tag = 'scoped memory for multi_period_discriminator_forward.8']
  #allocation3 [shape = 'u8[512]{0}', space=smem, size = 0x200, scoped, tag = 'prefetched SMEM operand 0']
  %s0 = inlined_call_operand.vmem [shape: s32[10], index: 0, kind: input, shape index: {}]
  %s1 = inlined_call_operand.vmem [shape: bf16[160,160], index: 1, kind: input, shape index: {}]
  %s2 = inlined_call_operand.vmem [shape: bf16[5,160,128], index: 2, kind: input, shape index: {}]
  %s3 = inlined_call_operand.vmem [shape: f32[5,1,128], index: 3, kind: input, shape index: {}]
  %s4 = inlined_call_operand.vmem [shape: f32[160,128], index: 4, kind: output, shape index: {}]
  %s5 = sld [smem:[#allocation0]]
  $region45: #{multi_period_discriminator_forward.8} parent=0
    _
  %s7 = ssub.s32 1, %s5
  %s8 = scalar_select 0, %s7, %s5
  %s9 = sshll.u32 %s0, 4
  %s10 = int_to_ptr.vmem [resolvable:$true] %s9
  %12 = dma.vmem_to_smem %s10, 16, [#allocation3], [#allocation2]
  %13 = dma.done [#allocation2], 16
  %14 = sfence
  loop: start=0, step=1, limit=12
  $region2: #{multi_period_discriminator_forward.8} parent=0 // loop_pre_header
    _
  $region3: #{multi_period_discriminator_forward.8} parent=0 // loop_header
    %s16 = sphi 0, %s20
    %p17 = scmp.ge.s32.totalorder %s16, 12
    %s26 = sphi 0, %s28
    %s29 = sphi 0, %s26
    %s30 = sphi 0, %s29
    %s46 = sphi 0, %s30
    %s54 = sphi 0, %s56
    %s57 = sphi 0, %s54
    %s58 = sphi 0, %s57
    %s74 = sphi 0, %s58
    %s82 = sphi 0, %s84
    %s85 = sphi 0, %s82
    %s86 = sphi 0, %s85
    %s102 = sphi 0, %s86
    %s108 = sphi 0, %s110
    %s111 = sphi 0, %s108
    %s112 = sphi 0, %s111
    %s128 = sphi 0, %s112
  $region4: #{multi_period_discriminator_forward.8} parent=0 // loop_header_branch
    %19 = sbr.rel (%p17) target = $region8
  $region5: #{multi_period_discriminator_forward.8} parent=0 // loop_body
    %s21 = ssub.s32 %s16, 1
    %s22 = ssub.s32 %s16, 2
    %s23 = sadd.s32 %s16, 1
    %s24 = ssub.s32 %s16, %s23
    %p25 = scmp.eq.s32.totalorder %s24, 0
    %s27 = sadd.s32 %s26, 1
    %s28 = scalar_select %p25, %s26, %s27
    %p31 = pneg %p25
    %p32 = scmp.eq.s32.totalorder %s16, 9
    %p33 = por %p31, %p32
    %p34 = scmp.ne.s32.totalorder %s26, %s29
    %p35 = scmp.eq.s32.totalorder %s16, 0
    %p36 = por %p34, %p35
    %p37 = scmp.ne.s32.totalorder %s26, %s29
    %p38 = scmp.eq.s32.totalorder %s21, 9
    %p39 = por %p37, %p38
    %p40 = scmp.ne.s32.totalorder %s29, %s30
    %p41 = scmp.eq.s32.totalorder %s21, 0
    %p42 = por %p40, %p41
    %p43 = scmp.ne.s32.totalorder %s29, %s30
    %p44 = scmp.eq.s32.totalorder %s22, 9
    %p45 = por %p43, %p44
    %p47 = scmp.ne.s32.totalorder %s30, %s46
    %p48 = scmp.eq.s32.totalorder %s22, 0
    %p49 = por %p47, %p48
    %s50 = sld [smem:[#allocation3 + %s16]]
    %s51 = sld [smem:[#allocation3 + %s23]]
    %s52 = ssub.s32 %s50, %s51
    %p53 = scmp.eq.s32.totalorder %s52, 0
    %s55 = sadd.s32 %s54, 1
    %s56 = scalar_select %p53, %s54, %s55
    %p59 = pneg %p53
    %p60 = scmp.eq.s32.totalorder %s16, 9
    %p61 = por %p59, %p60
    %p62 = scmp.ne.s32.totalorder %s54, %s57
    %p63 = scmp.eq.s32.totalorder %s16, 0
    %p64 = por %p62, %p63
    %p65 = scmp.ne.s32.totalorder %s54, %s57
    %p66 = scmp.eq.s32.totalorder %s21, 9
    %p67 = por %p65, %p66
    %p68 = scmp.ne.s32.totalorder %s57, %s58
    %p69 = scmp.eq.s32.totalorder %s21, 0
    %p70 = por %p68, %p69
    %p71 = scmp.ne.s32.totalorder %s57, %s58
    %p72 = scmp.eq.s32.totalorder %s22, 9
    %p73 = por %p71, %p72
    %p75 = scmp.ne.s32.totalorder %s58, %s74
    %p76 = scmp.eq.s32.totalorder %s22, 0
    %p77 = por %p75, %p76
    %s78 = sld [smem:[#allocation3 + %s16]]
    %s79 = sld [smem:[#allocation3 + %s23]]
    %s80 = ssub.s32 %s78, %s79
    %p81 = scmp.eq.s32.totalorder %s80, 0
    %s83 = sadd.s32 %s82, 1
    %s84 = scalar_select %p81, %s82, %s83
    %p87 = pneg %p81
    %p88 = scmp.eq.s32.totalorder %s16, 9
    %p89 = por %p87, %p88
    %p90 = scmp.ne.s32.totalorder %s82, %s85
    %p91 = scmp.eq.s32.totalorder %s16, 0
    %p92 = por %p90, %p91
    %p93 = scmp.ne.s32.totalorder %s82, %s85
    %p94 = scmp.eq.s32.totalorder %s21, 9
    %p95 = por %p93, %p94
    %p96 = scmp.ne.s32.totalorder %s85, %s86
    %p97 = scmp.eq.s32.totalorder %s21, 0
    %p98 = por %p96, %p97
    %p99 = scmp.ne.s32.totalorder %s85, %s86
    %p100 = scmp.eq.s32.totalorder %s22, 9
    %p101 = por %p99, %p100
    %p103 = scmp.ne.s32.totalorder %s86, %s102
    %p104 = scmp.eq.s32.totalorder %s22, 0
    %p105 = por %p103, %p104
    %s106 = ssub.s32 %s16, %s23
    %p107 = scmp.eq.s32.totalorder %s106, 0
    %s109 = sadd.s32 %s108, 1
    %s110 = scalar_select %p107, %s108, %s109
    %p113 = pneg %p107
    %p114 = scmp.eq.s32.totalorder %s16, 9
    %p115 = por %p113, %p114
    %p116 = scmp.ne.s32.totalorder %s108, %s111
    %p117 = scmp.eq.s32.totalorder %s16, 0
    %p118 = por %p116, %p117
    %p119 = scmp.ne.s32.totalorder %s108, %s111
    %p120 = scmp.eq.s32.totalorder %s21, 9
    %p121 = por %p119, %p120
    %p122 = scmp.ne.s32.totalorder %s111, %s112
    %p123 = scmp.eq.s32.totalorder %s21, 0
    %p124 = por %p122, %p123
    %p125 = scmp.ne.s32.totalorder %s111, %s112
    %p126 = scmp.eq.s32.totalorder %s22, 9
    %p127 = por %p125, %p126
    %p129 = scmp.ne.s32.totalorder %s112, %s128
    %p130 = scmp.eq.s32.totalorder %s22, 0
    %p131 = por %p129, %p130
    %p132 = scmp.le.s32.totalorder 1, %s16
    %p133 = scmp.lt.s32.totalorder %s16, 11
    %p134 = pnand %p132, %p133
    %p135 = pneg %p134
    // Predicated region
    $region9: #{multi_period_discriminator_forward.8} parent=5 // pred_check
      _
    $region10: #{multi_period_discriminator_forward.8} parent=5 // pred_check_branch
      %137 = sbr.rel (%p134) target = $region12
    $region11: #{multi_period_discriminator_forward.8} parent=5 // pred_region
      %s138 = ssub.s32 %s16, 1
    $region12: #{multi_period_discriminator_forward.8} parent=5 // pred_fallthru
      _
    %p139 = scmp.lt.s32.totalorder %s16, 10
    // Predicated region
    $region13: #{multi_period_discriminator_forward.8} parent=5 // pred_check
      %p140 = pneg %p139
    $region14: #{multi_period_discriminator_forward.8} parent=5 // pred_check_branch
      %142 = sbr.rel (%p140) target = $region16
    $region15: #{multi_period_discriminator_forward.8} parent=5 // pred_region
      // Predicated region
      $region17: #{multi_period_discriminator_forward.8} parent=15 // pred_check
        %p143 = pneg %p36
      $region18: #{multi_period_discriminator_forward.8} parent=15 // pred_check_branch
        %145 = sbr.rel (%p143) target = $region20
      $region19: #{multi_period_discriminator_forward.8} parent=15 // pred_region
        %s146 = smul.u32 2, %s16
        %p147 = scmp.lt.s32.totalorder %s146, 19
        %s148 = scalar_select %p147, %s146, 19
        %s149 = smul.addr %s148, 2
        %s150 = smul.addr %s149, 4
        %s151 = scalar_lea.vmem %s1, %s150
        %s152 = smul.u32 2, %s16
      $region20: #{multi_period_discriminator_forward.8} parent=15 // pred_fallthru
        _
      // Predicated region
      $region21: #{multi_period_discriminator_forward.8} parent=15 // pred_check
        %p153 = pneg %p64
      $region22: #{multi_period_discriminator_forward.8} parent=15 // pred_check_branch
        %155 = sbr.rel (%p153) target = $region24
      $region23: #{multi_period_discriminator_forward.8} parent=15 // pred_region
        %s156 = sld [smem:[#allocation3 + %s16]]
        %p157 = scmp.lt.s32.totalorder %s156, 4
        %s158 = scalar_select %p157, %s156, 4
        %s159 = smul.addr %s158, 20
        %s160 = smul.addr %s159, 4
        %s161 = scalar_lea.vmem %s2, %s160
        %s162 = sld [smem:[#allocation3 + %s16]]
      $region24: #{multi_period_discriminator_forward.8} parent=15 // pred_fallthru
        _
      // Predicated region
      $region25: #{multi_period_discriminator_forward.8} parent=15 // pred_check
        %p163 = pneg %p92
      $region26: #{multi_period_discriminator_forward.8} parent=15 // pred_check_branch
        %165 = sbr.rel (%p163) target = $region28
      $region27: #{multi_period_discriminator_forward.8} parent=15 // pred_region
        %s166 = sld [smem:[#allocation3 + %s16]]
        %p167 = scmp.lt.s32.totalorder %s166, 4
        %s168 = scalar_select %p167, %s166, 4
        %s169 = scalar_lea.vmem %s3, %s168
        %s170 = sld [smem:[#allocation3 + %s16]]
      $region28: #{multi_period_discriminator_forward.8} parent=15 // pred_fallthru
        _
    $region16: #{multi_period_discriminator_forward.8} parent=5 // pred_fallthru
      _
    %p171 = scmp.le.s32.totalorder 1, %s16
    %p172 = scmp.lt.s32.totalorder %s16, 11
    %p173 = pnand %p171, %p172
    %p174 = pneg %p173
    // Predicated region
    $region29: #{multi_period_discriminator_forward.8} parent=5 // pred_check
      _
    $region30: #{multi_period_discriminator_forward.8} parent=5 // pred_check_branch
      %176 = sbr.rel (%p173) target = $region32
    $region31: #{multi_period_discriminator_forward.8} parent=5 // pred_region
      %s177 = ssub.s32 %s16, 1
      %s178 = smul.u32 2, %s21
      %p179 = scmp.lt.s32.totalorder %s178, 19
      %s180 = scalar_select %p179, %s178, 19
      %s181 = smul.addr %s180, 2
      %s182 = smul.addr %s181, 4
      %s183 = scalar_lea.vmem %s1, %s182
      %p184 = pneg %p42
      %p185 = pneg %p39
      %s186 = sld [smem:[#allocation3 + %s21]]
      %p187 = scmp.lt.s32.totalorder %s186, 4
      %s188 = scalar_select %p187, %s186, 4
      %s189 = smul.addr %s188, 20
      %s190 = smul.addr %s189, 4
      %s191 = scalar_lea.vmem %s2, %s190
      %p192 = pneg %p70
      %p193 = pneg %p67
      %s194 = sld [smem:[#allocation3 + %s21]]
      %p195 = scmp.lt.s32.totalorder %s194, 4
      %s196 = scalar_select %p195, %s194, 4
      %s197 = scalar_lea.vmem %s3, %s196
      %p198 = pneg %p98
      %p199 = pneg %p95
      %p200 = pneg %p124
      %p201 = pneg %p121
      %s202 = smul.u32 2, %s21
      %p203 = scmp.lt.s32.totalorder %s202, 19
      %s204 = scalar_select %p203, %s202, 19
      %s205 = smul.addr %s204, 8
      %s206 = scalar_lea.vmem %s4, %s205
      %s207 = smul.u32 2, %s21
      %p208 = scmp.lt.s32.totalorder %s207, 19
      %s209 = scalar_select %p208, %s207, 19
      %s210 = smul.addr %s209, 2
      %s211 = smul.addr %s210, 4
      %s212 = scalar_lea.vmem %s1, %s211
      %s213 = smul.u32 2, %s21
      %s214 = sld [smem:[#allocation3 + %s21]]
      %p215 = scmp.lt.s32.totalorder %s214, 4
      %s216 = scalar_select %p215, %s214, 4
      %s217 = smul.addr %s216, 20
      %s218 = smul.addr %s217, 4
      %s219 = scalar_lea.vmem %s2, %s218
      %s220 = sld [smem:[#allocation3 + %s21]]
      %s221 = sld [smem:[#allocation3 + %s21]]
      %p222 = scmp.lt.s32.totalorder %s221, 4
      %s223 = scalar_select %p222, %s221, 4
      %s224 = scalar_lea.vmem %s3, %s223
      %s225 = sld [smem:[#allocation3 + %s21]]
      %s226 = smul.u32 2, %s21
      %p227 = scmp.lt.s32.totalorder %s226, 19
      %s228 = scalar_select %p227, %s226, 19
      %s229 = smul.addr %s228, 8
      %s230 = scalar_lea.vmem %s4, %s229
      %s231 = smul.u32 2, %s21
      %v233 = vld [vmem:[%s212] sm:$0xff]
      %v234 = vld [vmem:[%s212 + $0x8] sm:$0xff]
      %v235 = vld [vmem:[%s219] sm:$0xf]
      %v236 = vld [vmem:[%s219 + $0x4] sm:$0xf]
      %v237 = vld [vmem:[%s219 + $0x8] sm:$0xf]
      %v238 = vld [vmem:[%s219 + $0xc] sm:$0xf]
      %v239 = vld [vmem:[%s219 + $0x10] sm:$0xf]
      %v240 = vld [vmem:[%s219 + $0x14] sm:$0xf]
      %v241 = vld [vmem:[%s219 + $0x18] sm:$0xf]
      %v242 = vld [vmem:[%s219 + $0x1c] sm:$0xf]
      %v243 = vld [vmem:[%s219 + $0x20] sm:$0xf]
      %v244 = vld [vmem:[%s219 + $0x24] sm:$0xf]
      %v245 = vld [vmem:[%s219 + $0x28] sm:$0xf]
      %v246 = vld [vmem:[%s219 + $0x2c] sm:$0xf]
      %v247 = vld [vmem:[%s219 + $0x30] sm:$0xf]
      %v248 = vld [vmem:[%s219 + $0x34] sm:$0xf]
      %v249 = vld [vmem:[%s219 + $0x38] sm:$0xf]
      %v250 = vld [vmem:[%s219 + $0x3c] sm:$0xf]
      %v251 = vld [vmem:[%s219 + $0x40] sm:$0xf]
      %v252 = vld [vmem:[%s219 + $0x44] sm:$0xf]
      %v253 = vld [vmem:[%s219 + $0x48] sm:$0xf]
      %v254 = vld [vmem:[%s219 + $0x4c] sm:$0xf]
      %v255 = vld [vmem:[%s224] sm:$0x1]
      %v257 = vlaneseq
      %v258 = vshrl.u32 %v257, 7
      %v259 = vsub.s32 0, %v258
      %v260 = vrot.slane %v255, %v259
      %v264 = vunpack.c.l.b16 %v233
      %v265 = vunpack.c.h.b16 %v233
      %v266 = vunpack.c.l.b16 %v234
      %v267 = vunpack.c.h.b16 %v234
      %v268 = vpack.c.b16 %v266, %v264
      %v269 = vpack.c.b16 %v267, %v265
      %v291 = vunpack.c.l.b16 %v235
      %v292 = vunpack.c.l.b16 %v236
      %v293 = vunpack.c.l.b16 %v237
      %v294 = vunpack.c.l.b16 %v238
      %v295 = vunpack.c.l.b16 %v239
      %v296 = vunpack.c.l.b16 %v240
      %v297 = vunpack.c.l.b16 %v241
      %v298 = vunpack.c.l.b16 %v242
      %v299 = vunpack.c.l.b16 %v243
      %v300 = vunpack.c.l.b16 %v244
      %v301 = vunpack.c.l.b16 %v245
      %v302 = vunpack.c.l.b16 %v246
      %v303 = vunpack.c.l.b16 %v247
      %v304 = vunpack.c.l.b16 %v248
      %v305 = vunpack.c.l.b16 %v249
      %v306 = vunpack.c.l.b16 %v250
      %v307 = vunpack.c.l.b16 %v251
      %v308 = vunpack.c.l.b16 %v252
      %v309 = vunpack.c.l.b16 %v253
      %v310 = vunpack.c.l.b16 %v254
      %v311 = vpack.c.b16 %v292, %v291
      %v312 = vpack.c.b16 %v294, %v293
      %v313 = vpack.c.b16 %v296, %v295
      %v314 = vpack.c.b16 %v298, %v297
      %v315 = vpack.c.b16 %v300, %v299
      %v316 = vpack.c.b16 %v302, %v301
      %v317 = vpack.c.b16 %v304, %v303
      %v318 = vpack.c.b16 %v306, %v305
      %v319 = vpack.c.b16 %v308, %v307
      %v320 = vpack.c.b16 %v310, %v309
      %vm331 = vcmask 261120
      %v333 = vsel %vm331, %v269, 0
      %335 = vmatprep.subr.bf16.mxu0 0
      %336 = vmatpush1.bf16.msra.mxu0 %v311
      %337 = vmatprep.subr.bf16.mxu0 0
      %338 = vmatpush1.bf16.msra.mxu0 %v312
      %339 = vmatprep.subr.bf16.mxu0 0
      %340 = vmatpush1.bf16.msra.mxu0 %v313
      %341 = vmatprep.subr.bf16.mxu0 0
      %342 = vmatpush1.bf16.msra.mxu0 %v314
      %343 = vmatprep.subr.bf16.mxu0 0
      %344 = vmatpush1.bf16.msra.mxu0 %v315
      %345 = vmatprep.subr.bf16.mxu0 0
      %346 = vmatpush1.bf16.msra.mxu0 %v316
      %347 = vmatprep.subr.bf16.mxu0 0
      %348 = vmatpush1.bf16.msra.mxu0 %v317
      %349 = vmatprep.subr.bf16.mxu0 0
      %350 = vmatpush1.bf16.msra.mxu0 %v318
      %351 = vmatprep.subr.bf16.mxu0 0
      %352 = vmatpush1.bf16.msra.mxu0 %v319
      %353 = vmatprep.subr.bf16.mxu0 0
      %354 = vmatpush1.bf16.msra.mxu0 %v320
      %355 = vmatprep.subr.bf16.mxu0 0
      %356 = vmatpush1.bf16.msra.mxu0 0
      %357 = vmatprep.subr.bf16.mxu0 0
      %358 = vmatpush1.bf16.msra.mxu0 0
      %359 = vmatprep.subr.bf16.mxu0 0
      %360 = vmatpush1.bf16.msra.mxu0 0
      %361 = vmatprep.subr.bf16.mxu0 0
      %362 = vmatpush1.bf16.msra.mxu0 0
      %363 = vmatprep.subr.bf16.mxu0 0
      %364 = vmatpush1.bf16.msra.mxu0 0
      %365 = vmatprep.subr.bf16.mxu0 0
      %366 = vmatpush1.bf16.msra.mxu0 0
      %367 = vmatprep.mubr.bf16.mxu0 %v333
      %368 = vmatmul.mubr.bf16.gmra.mrb[0].mxu0 %v268
      %v369 = vpop.f32.mrb[0].mxu0
      %v370 = vadd.f32 %v260, %v369
      %v371 = vpop.f32.mrb[0].mxu0
      %v372 = vpop.f32.mrb[0].mxu0
      %v373 = vadd.f32 %v260, %v372
      %v374 = vpop.f32.mrb[0].mxu0
      %375 = vdwg.mxu0
      %vm376 = vcmp.ge.f32.partialorder %v370, 0.0
      %vm377 = vcmp.ge.f32.partialorder %v373, 0.0
      %v378 = vmul.f32 %v370, 0.1
      %v379 = vmul.f32 %v373, 0.1
      %v380 = vsel %vm376, %v370, %v378
      %v381 = vsel %vm377, %v373, %v379
      %382 = vst [vmem:[%s230] sm:$0xff] %v380
      %383 = vst [vmem:[%s230 + $0x8] sm:$0xff] %v381
      %s384 = smul.u32 2, %s21
      %p385 = scmp.lt.s32.totalorder %s384, 19
      %s386 = scalar_select %p385, %s384, 19
      %s387 = smul.addr %s386, 8
      %s388 = scalar_lea.vmem %s4, %s387
      // Predicated region
      $region33: #{multi_period_discriminator_forward.8} parent=31 // pred_check
        %p389 = pneg %p121
      $region34: #{multi_period_discriminator_forward.8} parent=31 // pred_check_branch
        %391 = sbr.rel (%p389) target = $region36
      $region35: #{multi_period_discriminator_forward.8} parent=31 // pred_region
        %s392 = smul.u32 2, %s21
      $region36: #{multi_period_discriminator_forward.8} parent=31 // pred_fallthru
        _
    $region32: #{multi_period_discriminator_forward.8} parent=5 // pred_fallthru
      _
    %p393 = scmp.le.s32.totalorder 2, %s16
    // Predicated region
    $region37: #{multi_period_discriminator_forward.8} parent=5 // pred_check
      %p394 = pneg %p393
    $region38: #{multi_period_discriminator_forward.8} parent=5 // pred_check_branch
      %396 = sbr.rel (%p394) target = $region40
    $region39: #{multi_period_discriminator_forward.8} parent=5 // pred_region
      %s397 = ssub.s32 %s16, 2
      // Predicated region
      $region41: #{multi_period_discriminator_forward.8} parent=39 // pred_check
        %p398 = pneg %p127
      $region42: #{multi_period_discriminator_forward.8} parent=39 // pred_check_branch
        %400 = sbr.rel (%p398) target = $region44
      $region43: #{multi_period_discriminator_forward.8} parent=39 // pred_region
        %s401 = smul.u32 2, %s22
        %p402 = scmp.lt.s32.totalorder %s401, 19
        %s403 = scalar_select %p402, %s401, 19
        %s404 = smul.addr %s403, 8
        %s405 = scalar_lea.vmem %s4, %s404
      $region44: #{multi_period_discriminator_forward.8} parent=39 // pred_fallthru
        _
    $region40: #{multi_period_discriminator_forward.8} parent=5 // pred_fallthru
      _
  $region6: #{multi_period_discriminator_forward.8} parent=0 // loop_footer
    %s20 = sadd.s32 1, %s16
  $region7: #{multi_period_discriminator_forward.8} parent=0 // loop_footer_branch
    %15 = sbr.rel target = $region3
  $region8: #{multi_period_discriminator_forward.8} parent=0 // loop_exit
    _

// kernel: multi_period_discriminator_forward.9
$region0: #{multi_period_discriminator_forward.9}
  #allocation0 [shape = 'u32[]', space=smem, size = 0x4, offset = 0x4, fixed_abs, tag = 'smem constant byte address 0x4 - core index']
  #allocation1 [shape = 'u32[144,128]{1,0:T(1,128)}', space=vmem, size = 0x12000, scoped, tag = 'internal scratch']
  #allocation2 [shape = 's32[1]{0}', space=sflag, size = 0x4, scoped, tag = 'scoped memory for multi_period_discriminator_forward.9']
  #allocation3 [shape = 'u8[512]{0}', space=smem, size = 0x200, scoped, tag = 'prefetched SMEM operand 0']
  %s0 = inlined_call_operand.vmem [shape: s32[9], index: 0, kind: input, shape index: {}]
  %s1 = inlined_call_operand.vmem [shape: bf16[72,160], index: 1, kind: input, shape index: {}]
  %s2 = inlined_call_operand.vmem [shape: bf16[5,160,128], index: 2, kind: input, shape index: {}]
  %s3 = inlined_call_operand.vmem [shape: f32[5,1,128], index: 3, kind: input, shape index: {}]
  %s4 = inlined_call_operand.vmem [shape: f32[72,128], index: 4, kind: output, shape index: {}]
  %s5 = sld [smem:[#allocation0]]
  $region45: #{multi_period_discriminator_forward.9} parent=0
    _
  %s7 = ssub.s32 1, %s5
  %s8 = scalar_select 0, %s7, %s5
  %s9 = sshll.u32 %s0, 4
  %s10 = int_to_ptr.vmem [resolvable:$true] %s9
  %12 = dma.vmem_to_smem %s10, 16, [#allocation3], [#allocation2]
  %13 = dma.done [#allocation2], 16
  %14 = sfence
  loop: start=0, step=1, limit=11
  $region2: #{multi_period_discriminator_forward.9} parent=0 // loop_pre_header
    _
  $region3: #{multi_period_discriminator_forward.9} parent=0 // loop_header
    %s16 = sphi 0, %s20
    %p17 = scmp.ge.s32.totalorder %s16, 11
    %s26 = sphi 0, %s28
    %s29 = sphi 0, %s26
    %s30 = sphi 0, %s29
    %s46 = sphi 0, %s30
    %s54 = sphi 0, %s56
    %s57 = sphi 0, %s54
    %s58 = sphi 0, %s57
    %s74 = sphi 0, %s58
    %s82 = sphi 0, %s84
    %s85 = sphi 0, %s82
    %s86 = sphi 0, %s85
    %s102 = sphi 0, %s86
    %s108 = sphi 0, %s110
    %s111 = sphi 0, %s108
    %s112 = sphi 0, %s111
    %s128 = sphi 0, %s112
  $region4: #{multi_period_discriminator_forward.9} parent=0 // loop_header_branch
    %19 = sbr.rel (%p17) target = $region8
  $region5: #{multi_period_discriminator_forward.9} parent=0 // loop_body
    %s21 = ssub.s32 %s16, 1
    %s22 = ssub.s32 %s16, 2
    %s23 = sadd.s32 %s16, 1
    %s24 = ssub.s32 %s16, %s23
    %p25 = scmp.eq.s32.totalorder %s24, 0
    %s27 = sadd.s32 %s26, 1
    %s28 = scalar_select %p25, %s26, %s27
    %p31 = pneg %p25
    %p32 = scmp.eq.s32.totalorder %s16, 8
    %p33 = por %p31, %p32
    %p34 = scmp.ne.s32.totalorder %s26, %s29
    %p35 = scmp.eq.s32.totalorder %s16, 0
    %p36 = por %p34, %p35
    %p37 = scmp.ne.s32.totalorder %s26, %s29
    %p38 = scmp.eq.s32.totalorder %s21, 8
    %p39 = por %p37, %p38
    %p40 = scmp.ne.s32.totalorder %s29, %s30
    %p41 = scmp.eq.s32.totalorder %s21, 0
    %p42 = por %p40, %p41
    %p43 = scmp.ne.s32.totalorder %s29, %s30
    %p44 = scmp.eq.s32.totalorder %s22, 8
    %p45 = por %p43, %p44
    %p47 = scmp.ne.s32.totalorder %s30, %s46
    %p48 = scmp.eq.s32.totalorder %s22, 0
    %p49 = por %p47, %p48
    %s50 = sld [smem:[#allocation3 + %s16]]
    %s51 = sld [smem:[#allocation3 + %s23]]
    %s52 = ssub.s32 %s50, %s51
    %p53 = scmp.eq.s32.totalorder %s52, 0
    %s55 = sadd.s32 %s54, 1
    %s56 = scalar_select %p53, %s54, %s55
    %p59 = pneg %p53
    %p60 = scmp.eq.s32.totalorder %s16, 8
    %p61 = por %p59, %p60
    %p62 = scmp.ne.s32.totalorder %s54, %s57
    %p63 = scmp.eq.s32.totalorder %s16, 0
    %p64 = por %p62, %p63
    %p65 = scmp.ne.s32.totalorder %s54, %s57
    %p66 = scmp.eq.s32.totalorder %s21, 8
    %p67 = por %p65, %p66
    %p68 = scmp.ne.s32.totalorder %s57, %s58
    %p69 = scmp.eq.s32.totalorder %s21, 0
    %p70 = por %p68, %p69
    %p71 = scmp.ne.s32.totalorder %s57, %s58
    %p72 = scmp.eq.s32.totalorder %s22, 8
    %p73 = por %p71, %p72
    %p75 = scmp.ne.s32.totalorder %s58, %s74
    %p76 = scmp.eq.s32.totalorder %s22, 0
    %p77 = por %p75, %p76
    %s78 = sld [smem:[#allocation3 + %s16]]
    %s79 = sld [smem:[#allocation3 + %s23]]
    %s80 = ssub.s32 %s78, %s79
    %p81 = scmp.eq.s32.totalorder %s80, 0
    %s83 = sadd.s32 %s82, 1
    %s84 = scalar_select %p81, %s82, %s83
    %p87 = pneg %p81
    %p88 = scmp.eq.s32.totalorder %s16, 8
    %p89 = por %p87, %p88
    %p90 = scmp.ne.s32.totalorder %s82, %s85
    %p91 = scmp.eq.s32.totalorder %s16, 0
    %p92 = por %p90, %p91
    %p93 = scmp.ne.s32.totalorder %s82, %s85
    %p94 = scmp.eq.s32.totalorder %s21, 8
    %p95 = por %p93, %p94
    %p96 = scmp.ne.s32.totalorder %s85, %s86
    %p97 = scmp.eq.s32.totalorder %s21, 0
    %p98 = por %p96, %p97
    %p99 = scmp.ne.s32.totalorder %s85, %s86
    %p100 = scmp.eq.s32.totalorder %s22, 8
    %p101 = por %p99, %p100
    %p103 = scmp.ne.s32.totalorder %s86, %s102
    %p104 = scmp.eq.s32.totalorder %s22, 0
    %p105 = por %p103, %p104
    %s106 = ssub.s32 %s16, %s23
    %p107 = scmp.eq.s32.totalorder %s106, 0
    %s109 = sadd.s32 %s108, 1
    %s110 = scalar_select %p107, %s108, %s109
    %p113 = pneg %p107
    %p114 = scmp.eq.s32.totalorder %s16, 8
    %p115 = por %p113, %p114
    %p116 = scmp.ne.s32.totalorder %s108, %s111
    %p117 = scmp.eq.s32.totalorder %s16, 0
    %p118 = por %p116, %p117
    %p119 = scmp.ne.s32.totalorder %s108, %s111
    %p120 = scmp.eq.s32.totalorder %s21, 8
    %p121 = por %p119, %p120
    %p122 = scmp.ne.s32.totalorder %s111, %s112
    %p123 = scmp.eq.s32.totalorder %s21, 0
    %p124 = por %p122, %p123
    %p125 = scmp.ne.s32.totalorder %s111, %s112
    %p126 = scmp.eq.s32.totalorder %s22, 8
    %p127 = por %p125, %p126
    %p129 = scmp.ne.s32.totalorder %s112, %s128
    %p130 = scmp.eq.s32.totalorder %s22, 0
    %p131 = por %p129, %p130
    %p132 = scmp.le.s32.totalorder 1, %s16
    %p133 = scmp.lt.s32.totalorder %s16, 10
    %p134 = pnand %p132, %p133
    %p135 = pneg %p134
    // Predicated region
    $region9: #{multi_period_discriminator_forward.9} parent=5 // pred_check
      _
    $region10: #{multi_period_discriminator_forward.9} parent=5 // pred_check_branch
      %137 = sbr.rel (%p134) target = $region12
    $region11: #{multi_period_discriminator_forward.9} parent=5 // pred_region
      %s138 = ssub.s32 %s16, 1
    $region12: #{multi_period_discriminator_forward.9} parent=5 // pred_fallthru
      _
    %p139 = scmp.lt.s32.totalorder %s16, 9
    // Predicated region
    $region13: #{multi_period_discriminator_forward.9} parent=5 // pred_check
      %p140 = pneg %p139
    $region14: #{multi_period_discriminator_forward.9} parent=5 // pred_check_branch
      %142 = sbr.rel (%p140) target = $region16
    $region15: #{multi_period_discriminator_forward.9} parent=5 // pred_region
      // Predicated region
      $region17: #{multi_period_discriminator_forward.9} parent=15 // pred_check
        %p143 = pneg %p36
      $region18: #{multi_period_discriminator_forward.9} parent=15 // pred_check_branch
        %145 = sbr.rel (%p143) target = $region20
      $region19: #{multi_period_discriminator_forward.9} parent=15 // pred_region
        %p146 = scmp.lt.s32.totalorder %s16, 8
        %s147 = scalar_select %p146, %s16, 8
        %s148 = smul.addr %s147, 2
        %s149 = smul.addr %s148, 4
        %s150 = scalar_lea.vmem %s1, %s149
      $region20: #{multi_period_discriminator_forward.9} parent=15 // pred_fallthru
        _
      // Predicated region
      $region21: #{multi_period_discriminator_forward.9} parent=15 // pred_check
        %p151 = pneg %p64
      $region22: #{multi_period_discriminator_forward.9} parent=15 // pred_check_branch
        %153 = sbr.rel (%p151) target = $region24
      $region23: #{multi_period_discriminator_forward.9} parent=15 // pred_region
        %s154 = sld [smem:[#allocation3 + %s16]]
        %p155 = scmp.lt.s32.totalorder %s154, 4
        %s156 = scalar_select %p155, %s154, 4
        %s157 = smul.addr %s156, 20
        %s158 = smul.addr %s157, 4
        %s159 = scalar_lea.vmem %s2, %s158
        %s160 = sld [smem:[#allocation3 + %s16]]
      $region24: #{multi_period_discriminator_forward.9} parent=15 // pred_fallthru
        _
      // Predicated region
      $region25: #{multi_period_discriminator_forward.9} parent=15 // pred_check
        %p161 = pneg %p92
      $region26: #{multi_period_discriminator_forward.9} parent=15 // pred_check_branch
        %163 = sbr.rel (%p161) target = $region28
      $region27: #{multi_period_discriminator_forward.9} parent=15 // pred_region
        %s164 = sld [smem:[#allocation3 + %s16]]
        %p165 = scmp.lt.s32.totalorder %s164, 4
        %s166 = scalar_select %p165, %s164, 4
        %s167 = scalar_lea.vmem %s3, %s166
        %s168 = sld [smem:[#allocation3 + %s16]]
      $region28: #{multi_period_discriminator_forward.9} parent=15 // pred_fallthru
        _
    $region16: #{multi_period_discriminator_forward.9} parent=5 // pred_fallthru
      _
    %p169 = scmp.le.s32.totalorder 1, %s16
    %p170 = scmp.lt.s32.totalorder %s16, 10
    %p171 = pnand %p169, %p170
    %p172 = pneg %p171
    // Predicated region
    $region29: #{multi_period_discriminator_forward.9} parent=5 // pred_check
      _
    $region30: #{multi_period_discriminator_forward.9} parent=5 // pred_check_branch
      %174 = sbr.rel (%p171) target = $region32
    $region31: #{multi_period_discriminator_forward.9} parent=5 // pred_region
      %s175 = ssub.s32 %s16, 1
      %p176 = scmp.lt.s32.totalorder %s21, 8
      %s177 = scalar_select %p176, %s21, 8
      %s178 = smul.addr %s177, 2
      %s179 = smul.addr %s178, 4
      %s180 = scalar_lea.vmem %s1, %s179
      %p181 = pneg %p42
      %p182 = pneg %p39
      %s183 = sld [smem:[#allocation3 + %s21]]
      %p184 = scmp.lt.s32.totalorder %s183, 4
      %s185 = scalar_select %p184, %s183, 4
      %s186 = smul.addr %s185, 20
      %s187 = smul.addr %s186, 4
      %s188 = scalar_lea.vmem %s2, %s187
      %p189 = pneg %p70
      %p190 = pneg %p67
      %s191 = sld [smem:[#allocation3 + %s21]]
      %p192 = scmp.lt.s32.totalorder %s191, 4
      %s193 = scalar_select %p192, %s191, 4
      %s194 = scalar_lea.vmem %s3, %s193
      %p195 = pneg %p98
      %p196 = pneg %p95
      %p197 = pneg %p124
      %p198 = pneg %p121
      %p199 = scmp.lt.s32.totalorder %s21, 8
      %s200 = scalar_select %p199, %s21, 8
      %s201 = smul.addr %s200, 8
      %s202 = scalar_lea.vmem %s4, %s201
      %p203 = scmp.lt.s32.totalorder %s21, 8
      %s204 = scalar_select %p203, %s21, 8
      %s205 = smul.addr %s204, 2
      %s206 = smul.addr %s205, 4
      %s207 = scalar_lea.vmem %s1, %s206
      %s208 = sld [smem:[#allocation3 + %s21]]
      %p209 = scmp.lt.s32.totalorder %s208, 4
      %s210 = scalar_select %p209, %s208, 4
      %s211 = smul.addr %s210, 20
      %s212 = smul.addr %s211, 4
      %s213 = scalar_lea.vmem %s2, %s212
      %s214 = sld [smem:[#allocation3 + %s21]]
      %s215 = sld [smem:[#allocation3 + %s21]]
      %p216 = scmp.lt.s32.totalorder %s215, 4
      %s217 = scalar_select %p216, %s215, 4
      %s218 = scalar_lea.vmem %s3, %s217
      %s219 = sld [smem:[#allocation3 + %s21]]
      %p220 = scmp.lt.s32.totalorder %s21, 8
      %s221 = scalar_select %p220, %s21, 8
      %s222 = smul.addr %s221, 8
      %s223 = scalar_lea.vmem %s4, %s222
      %v225 = vld [vmem:[%s207] sm:$0xff]
      %v226 = vld [vmem:[%s213] sm:$0xf]
      %v227 = vld [vmem:[%s213 + $0x4] sm:$0xf]
      %v228 = vld [vmem:[%s213 + $0x8] sm:$0xf]
      %v229 = vld [vmem:[%s213 + $0xc] sm:$0xf]
      %v230 = vld [vmem:[%s213 + $0x10] sm:$0xf]
      %v231 = vld [vmem:[%s213 + $0x14] sm:$0xf]
      %v232 = vld [vmem:[%s213 + $0x18] sm:$0xf]
      %v233 = vld [vmem:[%s213 + $0x1c] sm:$0xf]
      %v234 = vld [vmem:[%s213 + $0x20] sm:$0xf]
      %v235 = vld [vmem:[%s213 + $0x24] sm:$0xf]
      %v236 = vld [vmem:[%s213 + $0x28] sm:$0xf]
      %v237 = vld [vmem:[%s213 + $0x2c] sm:$0xf]
      %v238 = vld [vmem:[%s213 + $0x30] sm:$0xf]
      %v239 = vld [vmem:[%s213 + $0x34] sm:$0xf]
      %v240 = vld [vmem:[%s213 + $0x38] sm:$0xf]
      %v241 = vld [vmem:[%s213 + $0x3c] sm:$0xf]
      %v242 = vld [vmem:[%s213 + $0x40] sm:$0xf]
      %v243 = vld [vmem:[%s213 + $0x44] sm:$0xf]
      %v244 = vld [vmem:[%s213 + $0x48] sm:$0xf]
      %v245 = vld [vmem:[%s213 + $0x4c] sm:$0xf]
      %v246 = vld [vmem:[%s218] sm:$0x1]
      %v248 = vlaneseq
      %v249 = vshrl.u32 %v248, 7
      %v250 = vsub.s32 0, %v249
      %v251 = vrot.slane %v246, %v250
      %v254 = vunpack.c.l.b16 %v225
      %v255 = vunpack.c.h.b16 %v225
      %v256 = vpack.c.b16 %v254, %v254
      %v257 = vpack.c.b16 %v255, %v255
      %v279 = vunpack.c.l.b16 %v226
      %v280 = vunpack.c.l.b16 %v227
      %v281 = vunpack.c.l.b16 %v228
      %v282 = vunpack.c.l.b16 %v229
      %v283 = vunpack.c.l.b16 %v230
      %v284 = vunpack.c.l.b16 %v231
      %v285 = vunpack.c.l.b16 %v232
      %v286 = vunpack.c.l.b16 %v233
      %v287 = vunpack.c.l.b16 %v234
      %v288 = vunpack.c.l.b16 %v235
      %v289 = vunpack.c.l.b16 %v236
      %v290 = vunpack.c.l.b16 %v237
      %v291 = vunpack.c.l.b16 %v238
      %v292 = vunpack.c.l.b16 %v239
      %v293 = vunpack.c.l.b16 %v240
      %v294 = vunpack.c.l.b16 %v241
      %v295 = vunpack.c.l.b16 %v242
      %v296 = vunpack.c.l.b16 %v243
      %v297 = vunpack.c.l.b16 %v244
      %v298 = vunpack.c.l.b16 %v245
      %v299 = vpack.c.b16 %v280, %v279
      %v300 = vpack.c.b16 %v282, %v281
      %v301 = vpack.c.b16 %v284, %v283
      %v302 = vpack.c.b16 %v286, %v285
      %v303 = vpack.c.b16 %v288, %v287
      %v304 = vpack.c.b16 %v290, %v289
      %v305 = vpack.c.b16 %v292, %v291
      %v306 = vpack.c.b16 %v294, %v293
      %v307 = vpack.c.b16 %v296, %v295
      %v308 = vpack.c.b16 %v298, %v297
      %vm319 = vcmask 261120
      %v321 = vsel %vm319, %v257, 0
      %323 = vmatprep.subr.bf16.mxu0 0
      %324 = vmatpush1.bf16.msra.mxu0 %v299
      %325 = vmatprep.subr.bf16.mxu0 0
      %326 = vmatpush1.bf16.msra.mxu0 %v300
      %327 = vmatprep.subr.bf16.mxu0 0
      %328 = vmatpush1.bf16.msra.mxu0 %v301
      %329 = vmatprep.subr.bf16.mxu0 0
      %330 = vmatpush1.bf16.msra.mxu0 %v302
      %331 = vmatprep.subr.bf16.mxu0 0
      %332 = vmatpush1.bf16.msra.mxu0 %v303
      %333 = vmatprep.subr.bf16.mxu0 0
      %334 = vmatpush1.bf16.msra.mxu0 %v304
      %335 = vmatprep.subr.bf16.mxu0 0
      %336 = vmatpush1.bf16.msra.mxu0 %v305
      %337 = vmatprep.subr.bf16.mxu0 0
      %338 = vmatpush1.bf16.msra.mxu0 %v306
      %339 = vmatprep.subr.bf16.mxu0 0
      %340 = vmatpush1.bf16.msra.mxu0 %v307
      %341 = vmatprep.subr.bf16.mxu0 0
      %342 = vmatpush1.bf16.msra.mxu0 %v308
      %343 = vmatprep.subr.bf16.mxu0 0
      %344 = vmatpush1.bf16.msra.mxu0 0
      %345 = vmatprep.subr.bf16.mxu0 0
      %346 = vmatpush1.bf16.msra.mxu0 0
      %347 = vmatprep.subr.bf16.mxu0 0
      %348 = vmatpush1.bf16.msra.mxu0 0
      %349 = vmatprep.subr.bf16.mxu0 0
      %350 = vmatpush1.bf16.msra.mxu0 0
      %351 = vmatprep.subr.bf16.mxu0 0
      %352 = vmatpush1.bf16.msra.mxu0 0
      %353 = vmatprep.subr.bf16.mxu0 0
      %354 = vmatpush1.bf16.msra.mxu0 0
      %355 = vmatprep.mubr.bf16.mxu0 %v321
      %356 = vmatmul.mubr.bf16.gmra.mrb[0].mxu0 %v256
      %v357 = vpop.f32.mrb[0].mxu0
      %v358 = vadd.f32 %v251, %v357
      %v359 = vpop.f32.mrb[0].mxu0
      %v360 = vpop.f32.mrb[0].mxu0
      %v361 = vpop.f32.mrb[0].mxu0
      %362 = vdwg.mxu0
      %vm363 = vcmp.ge.f32.partialorder %v358, 0.0
      %v364 = vmul.f32 %v358, 0.1
      %v365 = vsel %vm363, %v358, %v364
      %366 = vst [vmem:[%s223] sm:$0xff] %v365
      %p367 = scmp.lt.s32.totalorder %s21, 8
      %s368 = scalar_select %p367, %s21, 8
      %s369 = smul.addr %s368, 8
      %s370 = scalar_lea.vmem %s4, %s369
      // Predicated region
      $region33: #{multi_period_discriminator_forward.9} parent=31 // pred_check
        %p371 = pneg %p121
      $region34: #{multi_period_discriminator_forward.9} parent=31 // pred_check_branch
        %373 = sbr.rel (%p371) target = $region36
      $region35: #{multi_period_discriminator_forward.9} parent=31 // pred_region
        _
      $region36: #{multi_period_discriminator_forward.9} parent=31 // pred_fallthru
        _
    $region32: #{multi_period_discriminator_forward.9} parent=5 // pred_fallthru
      _
    %p374 = scmp.le.s32.totalorder 2, %s16
    // Predicated region
    $region37: #{multi_period_discriminator_forward.9} parent=5 // pred_check
      %p375 = pneg %p374
    $region38: #{multi_period_discriminator_forward.9} parent=5 // pred_check_branch
      %377 = sbr.rel (%p375) target = $region40
    $region39: #{multi_period_discriminator_forward.9} parent=5 // pred_region
      %s378 = ssub.s32 %s16, 2
      // Predicated region
      $region41: #{multi_period_discriminator_forward.9} parent=39 // pred_check
        %p379 = pneg %p127
      $region42: #{multi_period_discriminator_forward.9} parent=39 // pred_check_branch
        %381 = sbr.rel (%p379) target = $region44
      $region43: #{multi_period_discriminator_forward.9} parent=39 // pred_region
        %p382 = scmp.lt.s32.totalorder %s22, 8
        %s383 = scalar_select %p382, %s22, 8
        %s384 = smul.addr %s383, 8
        %s385 = scalar_lea.vmem %s4, %s384
      $region44: #{multi_period_discriminator_forward.9} parent=39 // pred_fallthru
        _
    $region40: #{multi_period_discriminator_forward.9} parent=5 // pred_fallthru
      _
  $region6: #{multi_period_discriminator_forward.9} parent=0 // loop_footer
    %s20 = sadd.s32 1, %s16
  $region7: #{multi_period_discriminator_forward.9} parent=0 // loop_footer_branch
    %15 = sbr.rel target = $region3
  $region8: #{multi_period_discriminator_forward.9} parent=0 // loop_exit
    _

// kernel: multi_period_discriminator_forward.11
$region0: #{multi_period_discriminator_forward.11}
  #allocation0 [shape = 'u32[]', space=smem, size = 0x4, offset = 0x4, fixed_abs, tag = 'smem constant byte address 0x4 - core index']
  #allocation1 [shape = 'u32[144,128]{1,0:T(1,128)}', space=vmem, size = 0x12000, scoped, tag = 'internal scratch']
  #allocation2 [shape = 's32[1]{0}', space=sflag, size = 0x4, scoped, tag = 'scoped memory for multi_period_discriminator_forward.11']
  #allocation3 [shape = 'u8[512]{0}', space=smem, size = 0x200, scoped, tag = 'prefetched SMEM operand 0']
  %s0 = inlined_call_operand.vmem [shape: s32[9], index: 0, kind: input, shape index: {}]
  %s1 = inlined_call_operand.vmem [shape: bf16[72,96], index: 1, kind: input, shape index: {}]
  %s2 = inlined_call_operand.vmem [shape: bf16[5,96,128], index: 2, kind: input, shape index: {}]
  %s3 = inlined_call_operand.vmem [shape: f32[5,1,128], index: 3, kind: input, shape index: {}]
  %s4 = inlined_call_operand.vmem [shape: f32[72,128], index: 4, kind: output, shape index: {}]
  %s5 = sld [smem:[#allocation0]]
  $region45: #{multi_period_discriminator_forward.11} parent=0
    _
  %s7 = ssub.s32 1, %s5
  %s8 = scalar_select 0, %s7, %s5
  %s9 = sshll.u32 %s0, 4
  %s10 = int_to_ptr.vmem [resolvable:$true] %s9
  %12 = dma.vmem_to_smem %s10, 16, [#allocation3], [#allocation2]
  %13 = dma.done [#allocation2], 16
  %14 = sfence
  loop: start=0, step=1, limit=11
  $region2: #{multi_period_discriminator_forward.11} parent=0 // loop_pre_header
    _
  $region3: #{multi_period_discriminator_forward.11} parent=0 // loop_header
    %s16 = sphi 0, %s20
    %p17 = scmp.ge.s32.totalorder %s16, 11
    %s26 = sphi 0, %s28
    %s29 = sphi 0, %s26
    %s30 = sphi 0, %s29
    %s46 = sphi 0, %s30
    %s54 = sphi 0, %s56
    %s57 = sphi 0, %s54
    %s58 = sphi 0, %s57
    %s74 = sphi 0, %s58
    %s82 = sphi 0, %s84
    %s85 = sphi 0, %s82
    %s86 = sphi 0, %s85
    %s102 = sphi 0, %s86
    %s108 = sphi 0, %s110
    %s111 = sphi 0, %s108
    %s112 = sphi 0, %s111
    %s128 = sphi 0, %s112
  $region4: #{multi_period_discriminator_forward.11} parent=0 // loop_header_branch
    %19 = sbr.rel (%p17) target = $region8
  $region5: #{multi_period_discriminator_forward.11} parent=0 // loop_body
    %s21 = ssub.s32 %s16, 1
    %s22 = ssub.s32 %s16, 2
    %s23 = sadd.s32 %s16, 1
    %s24 = ssub.s32 %s16, %s23
    %p25 = scmp.eq.s32.totalorder %s24, 0
    %s27 = sadd.s32 %s26, 1
    %s28 = scalar_select %p25, %s26, %s27
    %p31 = pneg %p25
    %p32 = scmp.eq.s32.totalorder %s16, 8
    %p33 = por %p31, %p32
    %p34 = scmp.ne.s32.totalorder %s26, %s29
    %p35 = scmp.eq.s32.totalorder %s16, 0
    %p36 = por %p34, %p35
    %p37 = scmp.ne.s32.totalorder %s26, %s29
    %p38 = scmp.eq.s32.totalorder %s21, 8
    %p39 = por %p37, %p38
    %p40 = scmp.ne.s32.totalorder %s29, %s30
    %p41 = scmp.eq.s32.totalorder %s21, 0
    %p42 = por %p40, %p41
    %p43 = scmp.ne.s32.totalorder %s29, %s30
    %p44 = scmp.eq.s32.totalorder %s22, 8
    %p45 = por %p43, %p44
    %p47 = scmp.ne.s32.totalorder %s30, %s46
    %p48 = scmp.eq.s32.totalorder %s22, 0
    %p49 = por %p47, %p48
    %s50 = sld [smem:[#allocation3 + %s16]]
    %s51 = sld [smem:[#allocation3 + %s23]]
    %s52 = ssub.s32 %s50, %s51
    %p53 = scmp.eq.s32.totalorder %s52, 0
    %s55 = sadd.s32 %s54, 1
    %s56 = scalar_select %p53, %s54, %s55
    %p59 = pneg %p53
    %p60 = scmp.eq.s32.totalorder %s16, 8
    %p61 = por %p59, %p60
    %p62 = scmp.ne.s32.totalorder %s54, %s57
    %p63 = scmp.eq.s32.totalorder %s16, 0
    %p64 = por %p62, %p63
    %p65 = scmp.ne.s32.totalorder %s54, %s57
    %p66 = scmp.eq.s32.totalorder %s21, 8
    %p67 = por %p65, %p66
    %p68 = scmp.ne.s32.totalorder %s57, %s58
    %p69 = scmp.eq.s32.totalorder %s21, 0
    %p70 = por %p68, %p69
    %p71 = scmp.ne.s32.totalorder %s57, %s58
    %p72 = scmp.eq.s32.totalorder %s22, 8
    %p73 = por %p71, %p72
    %p75 = scmp.ne.s32.totalorder %s58, %s74
    %p76 = scmp.eq.s32.totalorder %s22, 0
    %p77 = por %p75, %p76
    %s78 = sld [smem:[#allocation3 + %s16]]
    %s79 = sld [smem:[#allocation3 + %s23]]
    %s80 = ssub.s32 %s78, %s79
    %p81 = scmp.eq.s32.totalorder %s80, 0
    %s83 = sadd.s32 %s82, 1
    %s84 = scalar_select %p81, %s82, %s83
    %p87 = pneg %p81
    %p88 = scmp.eq.s32.totalorder %s16, 8
    %p89 = por %p87, %p88
    %p90 = scmp.ne.s32.totalorder %s82, %s85
    %p91 = scmp.eq.s32.totalorder %s16, 0
    %p92 = por %p90, %p91
    %p93 = scmp.ne.s32.totalorder %s82, %s85
    %p94 = scmp.eq.s32.totalorder %s21, 8
    %p95 = por %p93, %p94
    %p96 = scmp.ne.s32.totalorder %s85, %s86
    %p97 = scmp.eq.s32.totalorder %s21, 0
    %p98 = por %p96, %p97
    %p99 = scmp.ne.s32.totalorder %s85, %s86
    %p100 = scmp.eq.s32.totalorder %s22, 8
    %p101 = por %p99, %p100
    %p103 = scmp.ne.s32.totalorder %s86, %s102
    %p104 = scmp.eq.s32.totalorder %s22, 0
    %p105 = por %p103, %p104
    %s106 = ssub.s32 %s16, %s23
    %p107 = scmp.eq.s32.totalorder %s106, 0
    %s109 = sadd.s32 %s108, 1
    %s110 = scalar_select %p107, %s108, %s109
    %p113 = pneg %p107
    %p114 = scmp.eq.s32.totalorder %s16, 8
    %p115 = por %p113, %p114
    %p116 = scmp.ne.s32.totalorder %s108, %s111
    %p117 = scmp.eq.s32.totalorder %s16, 0
    %p118 = por %p116, %p117
    %p119 = scmp.ne.s32.totalorder %s108, %s111
    %p120 = scmp.eq.s32.totalorder %s21, 8
    %p121 = por %p119, %p120
    %p122 = scmp.ne.s32.totalorder %s111, %s112
    %p123 = scmp.eq.s32.totalorder %s21, 0
    %p124 = por %p122, %p123
    %p125 = scmp.ne.s32.totalorder %s111, %s112
    %p126 = scmp.eq.s32.totalorder %s22, 8
    %p127 = por %p125, %p126
    %p129 = scmp.ne.s32.totalorder %s112, %s128
    %p130 = scmp.eq.s32.totalorder %s22, 0
    %p131 = por %p129, %p130
    %p132 = scmp.le.s32.totalorder 1, %s16
    %p133 = scmp.lt.s32.totalorder %s16, 10
    %p134 = pnand %p132, %p133
    %p135 = pneg %p134
    // Predicated region
    $region9: #{multi_period_discriminator_forward.11} parent=5 // pred_check
      _
    $region10: #{multi_period_discriminator_forward.11} parent=5 // pred_check_branch
      %137 = sbr.rel (%p134) target = $region12
    $region11: #{multi_period_discriminator_forward.11} parent=5 // pred_region
      %s138 = ssub.s32 %s16, 1
    $region12: #{multi_period_discriminator_forward.11} parent=5 // pred_fallthru
      _
    %p139 = scmp.lt.s32.totalorder %s16, 9
    // Predicated region
    $region13: #{multi_period_discriminator_forward.11} parent=5 // pred_check
      %p140 = pneg %p139
    $region14: #{multi_period_discriminator_forward.11} parent=5 // pred_check_branch
      %142 = sbr.rel (%p140) target = $region16
    $region15: #{multi_period_discriminator_forward.11} parent=5 // pred_region
      // Predicated region
      $region17: #{multi_period_discriminator_forward.11} parent=15 // pred_check
        %p143 = pneg %p36
      $region18: #{multi_period_discriminator_forward.11} parent=15 // pred_check_branch
        %145 = sbr.rel (%p143) target = $region20
      $region19: #{multi_period_discriminator_forward.11} parent=15 // pred_region
        %p146 = scmp.lt.s32.totalorder %s16, 8
        %s147 = scalar_select %p146, %s16, 8
        %s148 = smul.addr %s147, 4
        %s149 = scalar_lea.vmem %s1, %s148
      $region20: #{multi_period_discriminator_forward.11} parent=15 // pred_fallthru
        _
      // Predicated region
      $region21: #{multi_period_discriminator_forward.11} parent=15 // pred_check
        %p150 = pneg %p64
      $region22: #{multi_period_discriminator_forward.11} parent=15 // pred_check_branch
        %152 = sbr.rel (%p150) target = $region24
      $region23: #{multi_period_discriminator_forward.11} parent=15 // pred_region
        %s153 = sld [smem:[#allocation3 + %s16]]
        %p154 = scmp.lt.s32.totalorder %s153, 4
        %s155 = scalar_select %p154, %s153, 4
        %s156 = smul.addr %s155, 12
        %s157 = smul.addr %s156, 4
        %s158 = scalar_lea.vmem %s2, %s157
        %s159 = sld [smem:[#allocation3 + %s16]]
      $region24: #{multi_period_discriminator_forward.11} parent=15 // pred_fallthru
        _
      // Predicated region
      $region25: #{multi_period_discriminator_forward.11} parent=15 // pred_check
        %p160 = pneg %p92
      $region26: #{multi_period_discriminator_forward.11} parent=15 // pred_check_branch
        %162 = sbr.rel (%p160) target = $region28
      $region27: #{multi_period_discriminator_forward.11} parent=15 // pred_region
        %s163 = sld [smem:[#allocation3 + %s16]]
        %p164 = scmp.lt.s32.totalorder %s163, 4
        %s165 = scalar_select %p164, %s163, 4
        %s166 = scalar_lea.vmem %s3, %s165
        %s167 = sld [smem:[#allocation3 + %s16]]
      $region28: #{multi_period_discriminator_forward.11} parent=15 // pred_fallthru
        _
    $region16: #{multi_period_discriminator_forward.11} parent=5 // pred_fallthru
      _
    %p168 = scmp.le.s32.totalorder 1, %s16
    %p169 = scmp.lt.s32.totalorder %s16, 10
    %p170 = pnand %p168, %p169
    %p171 = pneg %p170
    // Predicated region
    $region29: #{multi_period_discriminator_forward.11} parent=5 // pred_check
      _
    $region30: #{multi_period_discriminator_forward.11} parent=5 // pred_check_branch
      %173 = sbr.rel (%p170) target = $region32
    $region31: #{multi_period_discriminator_forward.11} parent=5 // pred_region
      %s174 = ssub.s32 %s16, 1
      %p175 = scmp.lt.s32.totalorder %s21, 8
      %s176 = scalar_select %p175, %s21, 8
      %s177 = smul.addr %s176, 4
      %s178 = scalar_lea.vmem %s1, %s177
      %p179 = pneg %p42
      %p180 = pneg %p39
      %s181 = sld [smem:[#allocation3 + %s21]]
      %p182 = scmp.lt.s32.totalorder %s181, 4
      %s183 = scalar_select %p182, %s181, 4
      %s184 = smul.addr %s183, 12
      %s185 = smul.addr %s184, 4
      %s186 = scalar_lea.vmem %s2, %s185
      %p187 = pneg %p70
      %p188 = pneg %p67
      %s189 = sld [smem:[#allocation3 + %s21]]
      %p190 = scmp.lt.s32.totalorder %s189, 4
      %s191 = scalar_select %p190, %s189, 4
      %s192 = scalar_lea.vmem %s3, %s191
      %p193 = pneg %p98
      %p194 = pneg %p95
      %p195 = pneg %p124
      %p196 = pneg %p121
      %p197 = scmp.lt.s32.totalorder %s21, 8
      %s198 = scalar_select %p197, %s21, 8
      %s199 = smul.addr %s198, 8
      %s200 = scalar_lea.vmem %s4, %s199
      %p201 = scmp.lt.s32.totalorder %s21, 8
      %s202 = scalar_select %p201, %s21, 8
      %s203 = smul.addr %s202, 4
      %s204 = scalar_lea.vmem %s1, %s203
      %s205 = sld [smem:[#allocation3 + %s21]]
      %p206 = scmp.lt.s32.totalorder %s205, 4
      %s207 = scalar_select %p206, %s205, 4
      %s208 = smul.addr %s207, 12
      %s209 = smul.addr %s208, 4
      %s210 = scalar_lea.vmem %s2, %s209
      %s211 = sld [smem:[#allocation3 + %s21]]
      %s212 = sld [smem:[#allocation3 + %s21]]
      %p213 = scmp.lt.s32.totalorder %s212, 4
      %s214 = scalar_select %p213, %s212, 4
      %s215 = scalar_lea.vmem %s3, %s214
      %s216 = sld [smem:[#allocation3 + %s21]]
      %p217 = scmp.lt.s32.totalorder %s21, 8
      %s218 = scalar_select %p217, %s21, 8
      %s219 = smul.addr %s218, 8
      %s220 = scalar_lea.vmem %s4, %s219
      %v222 = vld [vmem:[%s204] sm:$0xf]
      %v223 = vld [vmem:[%s210] sm:$0xf]
      %v224 = vld [vmem:[%s210 + $0x4] sm:$0xf]
      %v225 = vld [vmem:[%s210 + $0x8] sm:$0xf]
      %v226 = vld [vmem:[%s210 + $0xc] sm:$0xf]
      %v227 = vld [vmem:[%s210 + $0x10] sm:$0xf]
      %v228 = vld [vmem:[%s210 + $0x14] sm:$0xf]
      %v229 = vld [vmem:[%s210 + $0x18] sm:$0xf]
      %v230 = vld [vmem:[%s210 + $0x1c] sm:$0xf]
      %v231 = vld [vmem:[%s210 + $0x20] sm:$0xf]
      %v232 = vld [vmem:[%s210 + $0x24] sm:$0xf]
      %v233 = vld [vmem:[%s210 + $0x28] sm:$0xf]
      %v234 = vld [vmem:[%s210 + $0x2c] sm:$0xf]
      %v235 = vld [vmem:[%s215] sm:$0x1]
      %v237 = vlaneseq
      %v238 = vshrl.u32 %v237, 7
      %v239 = vsub.s32 0, %v238
      %v240 = vrot.slane %v235, %v239
      %v254 = vunpack.c.l.b16 %v223
      %v255 = vunpack.c.l.b16 %v224
      %v256 = vunpack.c.l.b16 %v225
      %v257 = vunpack.c.l.b16 %v226
      %v258 = vunpack.c.l.b16 %v227
      %v259 = vunpack.c.l.b16 %v228
      %v260 = vunpack.c.l.b16 %v229
      %v261 = vunpack.c.l.b16 %v230
      %v262 = vunpack.c.l.b16 %v231
      %v263 = vunpack.c.l.b16 %v232
      %v264 = vunpack.c.l.b16 %v233
      %v265 = vunpack.c.l.b16 %v234
      %v266 = vpack.c.b16 %v255, %v254
      %v267 = vpack.c.b16 %v257, %v256
      %v268 = vpack.c.b16 %v259, %v258
      %v269 = vpack.c.b16 %v261, %v260
      %v270 = vpack.c.b16 %v263, %v262
      %v271 = vpack.c.b16 %v265, %v264
      %vm278 = vcmask 785408
      %v280 = vsel %vm278, %v222, 0
      %282 = vmatprep.subr.bf16.mxu0 0
      %283 = vmatpush1.bf16.msra.mxu0 %v266
      %284 = vmatprep.subr.bf16.mxu0 0
      %285 = vmatpush1.bf16.msra.mxu0 %v267
      %286 = vmatprep.subr.bf16.mxu0 0
      %287 = vmatpush1.bf16.msra.mxu0 %v268
      %288 = vmatprep.subr.bf16.mxu0 0
      %289 = vmatpush1.bf16.msra.mxu0 %v269
      %290 = vmatprep.subr.bf16.mxu0 0
      %291 = vmatpush1.bf16.msra.mxu0 %v270
      %292 = vmatprep.subr.bf16.mxu0 0
      %293 = vmatpush1.bf16.msra.mxu0 %v271
      %294 = vmatprep.subr.bf16.mxu0 0
      %295 = vmatpush1.bf16.msra.mxu0 0
      %296 = vmatprep.subr.bf16.mxu0 0
      %297 = vmatpush1.bf16.msra.mxu0 0
      %298 = vmatprep.subr.bf16.mxu0 0
      %299 = vmatpush1.bf16.msra.mxu0 0
      %300 = vmatprep.subr.bf16.mxu0 0
      %301 = vmatpush1.bf16.msra.mxu0 0
      %302 = vmatprep.subr.bf16.mxu0 0
      %303 = vmatpush1.bf16.msra.mxu0 0
      %304 = vmatprep.subr.bf16.mxu0 0
      %305 = vmatpush1.bf16.msra.mxu0 0
      %306 = vmatprep.subr.bf16.mxu0 0
      %307 = vmatpush1.bf16.msra.mxu0 0
      %308 = vmatprep.subr.bf16.mxu0 0
      %309 = vmatpush1.bf16.msra.mxu0 0
      %310 = vmatprep.subr.bf16.mxu0 0
      %311 = vmatpush1.bf16.msra.mxu0 0
      %312 = vmatprep.subr.bf16.mxu0 0
      %313 = vmatpush1.bf16.msra.mxu0 0
      %314 = vmatprep.mubr.bf16.mxu0 0
      %315 = vmatmul.mubr.bf16.gmra.mrb[0].mxu0 %v280
      %v316 = vpop.f32.mrb[0].mxu0
      %v317 = vadd.f32 %v240, %v316
      %v318 = vpop.f32.mrb[0].mxu0
      %v319 = vpop.f32.mrb[0].mxu0
      %v320 = vpop.f32.mrb[0].mxu0
      %321 = vdwg.mxu0
      %322 = vst [vmem:[%s220] sm:$0xff] %v317
      %p323 = scmp.lt.s32.totalorder %s21, 8
      %s324 = scalar_select %p323, %s21, 8
      %s325 = smul.addr %s324, 8
      %s326 = scalar_lea.vmem %s4, %s325
      // Predicated region
      $region33: #{multi_period_discriminator_forward.11} parent=31 // pred_check
        %p327 = pneg %p121
      $region34: #{multi_period_discriminator_forward.11} parent=31 // pred_check_branch
        %329 = sbr.rel (%p327) target = $region36
      $region35: #{multi_period_discriminator_forward.11} parent=31 // pred_region
        _
      $region36: #{multi_period_discriminator_forward.11} parent=31 // pred_fallthru
        _
    $region32: #{multi_period_discriminator_forward.11} parent=5 // pred_fallthru
      _
    %p330 = scmp.le.s32.totalorder 2, %s16
    // Predicated region
    $region37: #{multi_period_discriminator_forward.11} parent=5 // pred_check
      %p331 = pneg %p330
    $region38: #{multi_period_discriminator_forward.11} parent=5 // pred_check_branch
      %333 = sbr.rel (%p331) target = $region40
    $region39: #{multi_period_discriminator_forward.11} parent=5 // pred_region
      %s334 = ssub.s32 %s16, 2
      // Predicated region
      $region41: #{multi_period_discriminator_forward.11} parent=39 // pred_check
        %p335 = pneg %p127
      $region42: #{multi_period_discriminator_forward.11} parent=39 // pred_check_branch
        %337 = sbr.rel (%p335) target = $region44
      $region43: #{multi_period_discriminator_forward.11} parent=39 // pred_region
        %p338 = scmp.lt.s32.totalorder %s22, 8
        %s339 = scalar_select %p338, %s22, 8
        %s340 = smul.addr %s339, 8
        %s341 = scalar_lea.vmem %s4, %s340
      $region44: #{multi_period_discriminator_forward.11} parent=39 // pred_fallthru
        _
    $region40: #{multi_period_discriminator_forward.11} parent=5 // pred_fallthru
      _
  $region6: #{multi_period_discriminator_forward.11} parent=0 // loop_footer
    %s20 = sadd.s32 1, %s16
  $region7: #{multi_period_discriminator_forward.11} parent=0 // loop_footer_branch
    %15 = sbr.rel target = $region3
  $region8: #{multi_period_discriminator_forward.11} parent=0 // loop_exit
    _

</llo_original>
